<compile_context>
chip_gen: v6e
topology: v6e:2x2x1
jax: 0.10.0
libtpu: 0.0.40
codegen_flags: <defaults>
</compile_context>

<pallas_src>
import functools
import math

import jax
import jax.numpy as jnp
from jax.experimental import pallas as pl
from jax.experimental.pallas import tpu as pltpu

LANE = 128


def _rup(d, m=LANE):
    return ((d + m - 1) // m) * m


def _relu(x):
    return jnp.maximum(x, 0.0)


def _elu(x):
    # F.elu (alpha=1); exp only on the non-positive branch (overflow safe).
    return jnp.where(x > 0.0, x, jnp.exp(jnp.minimum(x, 0.0)) - 1.0)


def _mm(a, b):
    # MXU matmul, f32 accumulation.
    return jnp.dot(a, b, preferred_element_type=jnp.float32)


def _mm_nt(a, b):
    # a @ b.T without materializing the transpose (contract on the lane axis).
    return jax.lax.dot_general(a, b, (((1,), (1,)), ((), ())),
                               preferred_element_type=jnp.float32)


# ------------------------------ fused kernel -------------------------------

def gscl_kernel(a_ref, x_ref,
                wl1_ref, bl1_ref, wl2_ref, bl2_ref,
                wg1_ref, bg1_ref, wg2_ref, bg2_ref,
                wp1_ref, bp1_ref, wp2_ref, bp2_ref,
                out_ref, *, inv_temp):
    """Single fused step; both views batched along the node (M) axis.

    a_ref : (2N, 2N) block-diagonal normalized adjacency (f32)
    x_ref : (2N, Fp)  node features, view-1 rows then view-2 rows (bf16)
    """
    mm_dtype = wl1_ref.dtype                 # bf16 operands, f32 accumulation
    a = a_ref[...]
    x = x_ref[...]
    two_n = a.shape[0]
    n = two_n // 2

    # --- GcnNet.layer1: Linear -> ReLU -> Linear (shared weights, both views)
    t = _relu(_mm(x, wl1_ref[...]) + bl1_ref[...])
    feat = _mm(t.astype(mm_dtype), wl2_ref[...]) + bl2_ref[...]

    # --- GCN layer 1: relu(A @ (feat @ Wg1) + bg1); block-diagonal A does both
    # per-view aggregations in one matmul.  A stays f32 for parity.
    sup1 = _mm(feat.astype(mm_dtype), wg1_ref[...])
    h = _relu(_mm(a, sup1) + bg1_ref[...])

    # --- GCN layer 2 (encoder output): A @ (h @ Wg2) + bg2
    sup2 = _mm(h.astype(mm_dtype), wg2_ref[...])
    logits = _mm(a, sup2) + bg2_ref[...]

    # --- projection head: fc2(elu(fc1(.)))
    p = _elu(_mm(logits.astype(mm_dtype), wp1_ref[...]) + bp1_ref[...])
    z = _mm(p.astype(mm_dtype), wp2_ref[...]) + bp2_ref[...]

    z1 = z[:n]                               # (N, Zp) view-1 embeddings
    z2 = z[n:]                               # (N, Zp) view-2 embeddings

    # --- F.normalize(p=2, dim=1, eps=1e-12), f32
    inv1 = 1.0 / jnp.maximum(
        jnp.sqrt(jnp.sum(z1 * z1, axis=1, keepdims=True)), 1e-12)
    inv2 = 1.0 / jnp.maximum(
        jnp.sqrt(jnp.sum(z2 * z2, axis=1, keepdims=True)), 1e-12)
    n1 = z1 * inv1
    n2 = z2 * inv2

    # --- three (not four) similarity matmuls: sim(z2,z1) == sim(z1,z2).T.
    # bf16 MXU operands; exp / reductions / logs stay f32.
    n1b = n1.astype(mm_dtype)
    n2b = n2.astype(mm_dtype)
    e11 = jnp.exp(_mm_nt(n1b, n1b) * inv_temp)
    e22 = jnp.exp(_mm_nt(n2b, n2b) * inv_temp)
    e12 = jnp.exp(_mm_nt(n1b, n2b) * inv_temp)      # exp(sim(z1, z2) / T)

    # diag(sim(z1, z2)) directly from f32 row products (no mask / gather).
    d12 = jnp.exp(jnp.sum(n1 * n2, axis=1, keepdims=True) * inv_temp)
    # After L2 normalization diag(sim(z, z)) == 1 -> compile-time constant
    # (degenerate rows with ||z|| < 1e-12 excepted).
    diag_self = math.exp(inv_temp)

    row_e11 = jnp.sum(e11, axis=1, keepdims=True)   # (N, 1)
    row_e12 = jnp.sum(e12, axis=1, keepdims=True)   # (N, 1)
    # e22 is symmetric -> row sums == column sums; column sums of e12 are the
    # row sums of exp(sim(z2, z1)/T).  Both stay as (1, N) row vectors, so no
    # N x N transpose (or vector relayout) is ever materialized.
    col_e22 = jnp.sum(e22, axis=0, keepdims=True)   # (1, N)
    col_e12 = jnp.sum(e12, axis=0, keepdims=True)   # (1, N)

    x1 = row_e11 + row_e12 - diag_self              # (N, 1) denominators view-1
    x2 = col_e22 + col_e12 - diag_self              # (1, N) denominators view-2

    # mean(0.5*(l1+l2)) with -log(d/x) == log(x) - log(d); the final mean is
    # layout-agnostic so the (N,1) and (1,N) pieces reduce independently.
    s1 = jnp.sum(jnp.log(x1), axis=0, keepdims=True)        # (1, 1)
    s2 = jnp.sum(jnp.log(x2), axis=1, keepdims=True)        # (1, 1)
    sd = jnp.sum(jnp.log(d12), axis=0, keepdims=True)       # (1, 1)
    out_ref[...] = (s1 + s2 - 2.0 * sd) * (0.5 / n)


# ------------------------ one-time host-side setup ---------------------------

def prepare_gscl_inputs(params, adj1, adj2, feat1, feat2,
                        matmul_dtype=jnp.bfloat16):
    """Pad lane dims to multiples of 128, batch both views along the node axis,
    and build the block-diagonal adjacency.  Runs ONCE, off the hot path."""
    (wl1, bl1, wl2, bl2, wg1, bg1, wg2, bg2, wp1, bp1, wp2, bp2) = params
    n = feat1.shape[0]
    fp = _rup(feat1.shape[1])

    def pad_w(w):
        out = jnp.zeros((_rup(w.shape[0]), _rup(w.shape[1])), matmul_dtype)
        return out.at[: w.shape[0], : w.shape[1]].set(w.astype(matmul_dtype))

    def pad_b(b):
        out = jnp.zeros((1, _rup(b.shape[0])), jnp.float32)
        return out.at[0, : b.shape[0]].set(b.astype(jnp.float32))

    x_cat = jnp.zeros((2 * n, fp), matmul_dtype)
    x_cat = x_cat.at[:n, : feat1.shape[1]].set(feat1.astype(matmul_dtype))
    x_cat = x_cat.at[n:, : feat2.shape[1]].set(feat2.astype(matmul_dtype))

    # Block-diagonal adjacency, kept f32 (applied twice per view; f32 keeps
    # parity with the reference and the aggregation K dim is small).
    a_blk = jnp.zeros((2 * n, 2 * n), jnp.float32)
    a_blk = a_blk.at[:n, :n].set(adj1.astype(jnp.float32))
    a_blk = a_blk.at[n:, n:].set(adj2.astype(jnp.float32))

    w_pad = [pad_w(w) for w in (wl1, wl2, wg1, wg2, wp1, wp2)]
    b_pad = [pad_b(b) for b in (bl1, bl2, bg1, bg2, bp1, bp2)]
    ws = (w_pad[0], b_pad[0], w_pad[1], b_pad[1], w_pad[2], b_pad[2],
          w_pad[3], b_pad[3], w_pad[4], b_pad[4], w_pad[5], b_pad[5])
    return a_blk, x_cat, ws


# ------------------------------ jitted wrapper -------------------------------

@functools.partial(jax.jit, static_argnames=("temp",))
def gscl_pallas(a_blk, x_cat, ws, temp):
    two_n = a_blk.shape[0]
    n = two_n // 2
    zp = ws[10].shape[1]                     # padded embedding dim (Wp2 out)

    # Rough advisory cost estimate for the fused call.
    dense_flops = 2 * two_n * sum(ws[i].shape[0] * ws[i].shape[1]
                                  for i in range(0, 12, 2))
    agg_flops = 2 * 2 * two_n * two_n * LANE
    loss_flops = 3 * 2 * n * n * zp
    transcendentals = 3 * n * n + 4 * n
    bytes_accessed = (a_blk.size * a_blk.dtype.itemsize
                      + x_cat.size * x_cat.dtype.itemsize
                      + sum(w.size * w.dtype.itemsize for w in ws) + 4)

    vmem = pl.BlockSpec(memory_space=pltpu.MemorySpace.VMEM)
    out = pl.pallas_call(
        functools.partial(gscl_kernel, inv_temp=float(1.0 / temp)),
        out_shape=jax.ShapeDtypeStruct((1, 1), jnp.float32),
        in_specs=[vmem] * (2 + len(ws)),
        out_specs=vmem,
        compiler_params=pltpu.CompilerParams(
            vmem_limit_bytes=32 * 1024 * 1024),
        cost_estimate=pl.CostEstimate(
            flops=int(dense_flops + agg_flops + loss_flops),
            transcendentals=int(transcendentals),
            bytes_accessed=int(bytes_accessed)),
    )(a_blk, x_cat, *ws)
    return out[0, 0]


# --------------------------- pure-JAX reference -----------------------------

def reference_forward(params, adj1, adj2, feat1, feat2, temp):
    (wl1, bl1, wl2, bl2, wg1, bg1, wg2, bg2, wp1, bp1, wp2, bp2) = params

    def encoder(a, x):
        f = jnp.maximum(x @ wl1 + bl1, 0.0) @ wl2 + bl2
        h = jnp.maximum(a @ (f @ wg1) + bg1, 0.0)
        return a @ (h @ wg2) + bg2

    def proj(h):
        t = h @ wp1 + bp1
        t = jnp.where(t > 0.0, t, jnp.exp(jnp.minimum(t, 0.0)) - 1.0)
        return t @ wp2 + bp2

    def get_loss(z1, z2):
        n1 = z1 / jnp.maximum(jnp.linalg.norm(z1, axis=1, keepdims=True), 1e-12)
        n2 = z2 / jnp.maximum(jnp.linalg.norm(z2, axis=1, keepdims=True), 1e-12)
        refl = jnp.exp((n1 @ n1.T) / temp)
        btw = jnp.exp((n1 @ n2.T) / temp)
        xden = refl.sum(1) + btw.sum(1) - jnp.diag(refl)
        return -jnp.log(jnp.diag(btw) / xden)

    z1 = proj(encoder(adj1, feat1))
    z2 = proj(encoder(adj2, feat2))
    return jnp.mean((get_loss(z1, z2) + get_loss(z2, z1)) * 0.5)


# ------------------------------- parameters ---------------------------------

def init_params(key, in_dim, hid_dim, act_fn, out_dim):
    ks = jax.random.split(key, 10)

    def lin_w(k, i, o, scale):
        return jax.random.uniform(k, (i, o), jnp.float32, -scale, scale)

    wl1 = lin_w(ks[0], in_dim, 64, (1.0 / in_dim) ** 0.5)
    bl1 = jax.random.uniform(ks[1], (64,), jnp.float32, -0.1, 0.1)
    wl2 = lin_w(ks[2], 64, 32, (1.0 / 64) ** 0.5)
    bl2 = jax.random.uniform(ks[3], (32,), jnp.float32, -0.1, 0.1)
    wg1 = lin_w(ks[4], 32, hid_dim, (6.0 / 32) ** 0.5)       # kaiming_uniform-ish
    bg1 = jnp.zeros((hid_dim,), jnp.float32)
    wg2 = lin_w(ks[5], hid_dim, act_fn, (6.0 / hid_dim) ** 0.5)
    bg2 = jnp.zeros((act_fn,), jnp.float32)
    wp1 = lin_w(ks[6], act_fn, out_dim, (1.0 / act_fn) ** 0.5)
    bp1 = jax.random.uniform(ks[7], (out_dim,), jnp.float32, -0.1, 0.1)
    wp2 = lin_w(ks[8], out_dim, act_fn, (1.0 / out_dim) ** 0.5)
    bp2 = jax.random.uniform(ks[9], (act_fn,), jnp.float32, -0.1, 0.1)
    return (wl1, bl1, wl2, bl2, wg1, bg1, wg2, bg2, wp1, bp1, wp2, bp2)


def normalized_adjacency(key, n, avg_degree=4):
    """Example dense D^-1/2 (A + I) D^-1/2 adjacency (input construction)."""
    a = (jax.random.uniform(key, (n, n)) < avg_degree / n).astype(jnp.float32)
    a = jnp.maximum(a, a.T)
    a = jnp.maximum(a, jnp.eye(n, dtype=jnp.float32))
    dinv = jax.lax.rsqrt(jnp.sum(a, axis=1))
    return dinv[:, None] * a * dinv[None, :]


# ----------------------------------- main ------------------------------------

if __name__ == "__main__":
    key = jax.random.PRNGKey(0)
    # GSCL(in_dim=8, hid_dim=16, out_dim=32, num_layers=unused, act_fn=16, temp=0.5)
    N, IN_DIM, HID_DIM, ACT_FN, OUT_DIM = 16, 8, 16, 16, 32
    TEMP = 0.5

    k_f1, k_f2, k_a1, k_a2, k_p = jax.random.split(key, 5)
    feat1 = jax.random.normal(k_f1, (N, IN_DIM), jnp.float32)
    feat2 = jax.random.normal(k_f2, (N, IN_DIM), jnp.float32)
    adj1 = normalized_adjacency(k_a1, N)
    adj2 = normalized_adjacency(k_a2, N)
    params = init_params(k_p, IN_DIM, HID_DIM, ACT_FN, OUT_DIM)

    # One-time padding / batching (hoisted off the per-call hot path).
    a_blk, x_cat, ws = prepare_gscl_inputs(params, adj1, adj2, feat1, feat2)

    loss = jax.block_until_ready(gscl_pallas(a_blk, x_cat, ws, temp=TEMP))
    ref = jax.block_until_ready(
        reference_forward(params, adj1, adj2, feat1, feat2, TEMP))

    assert jnp.isfinite(loss), "loss is not finite"
    err = abs(float(loss) - float(ref))
    # bf16 matmul operands (f32 accumulation) vs. an all-f32 reference.
    tol = max(5e-2, 3e-2 * abs(float(ref)))
    assert err < tol, (float(loss), float(ref), err)
    print("KERNEL_OK")
</pallas_src>

<mosaic_0001>
module attributes {stable_mosaic.version = 11 : i64} {
  func.func @gscl_kernel(%arg0: memref<32x32xf32, #tpu.memory_space<vmem>>, %arg1: memref<32x128xbf16, #tpu.memory_space<vmem>>, %arg2: memref<128x128xbf16, #tpu.memory_space<vmem>>, %arg3: memref<1x128xf32, #tpu.memory_space<vmem>>, %arg4: memref<128x128xbf16, #tpu.memory_space<vmem>>, %arg5: memref<1x128xf32, #tpu.memory_space<vmem>>, %arg6: memref<128x128xbf16, #tpu.memory_space<vmem>>, %arg7: memref<1x128xf32, #tpu.memory_space<vmem>>, %arg8: memref<128x128xbf16, #tpu.memory_space<vmem>>, %arg9: memref<1x128xf32, #tpu.memory_space<vmem>>, %arg10: memref<128x128xbf16, #tpu.memory_space<vmem>>, %arg11: memref<1x128xf32, #tpu.memory_space<vmem>>, %arg12: memref<128x128xbf16, #tpu.memory_space<vmem>>, %arg13: memref<1x128xf32, #tpu.memory_space<vmem>>, %arg14: memref<1x1xf32, #tpu.memory_space<vmem>>) attributes {dimension_semantics = [], scalar_prefetch = 0 : i64, scratch_operands = 0 : i64, tpu.core_type = #tpu.core_type<tc>} {
    %c0 = arith.constant 0 : index
    %c0_0 = arith.constant 0 : index
    %0 = vector.load %arg0[%c0, %c0_0] : memref<32x32xf32, #tpu.memory_space<vmem>>, vector<32x32xf32>
    %c0_1 = arith.constant 0 : index
    %c0_2 = arith.constant 0 : index
    %1 = vector.load %arg1[%c0_1, %c0_2] : memref<32x128xbf16, #tpu.memory_space<vmem>>, vector<32x128xbf16>
    %c0_3 = arith.constant 0 : index
    %c0_4 = arith.constant 0 : index
    %2 = vector.load %arg2[%c0_3, %c0_4] : memref<128x128xbf16, #tpu.memory_space<vmem>>, vector<128x128xbf16>
    %cst = arith.constant dense<0.000000e+00> : vector<32x128xf32>
    %3 = tpu.matmul %1, %2, %cst {dimension_numbers = #tpu.dot_dimension_numbers<[1], [0], [0], [1], [0, 0, 1, 1], [], []>} : vector<32x128xbf16>, vector<128x128xbf16>, vector<32x128xf32> -> vector<32x128xf32>
    %c0_5 = arith.constant 0 : index
    %c0_6 = arith.constant 0 : index
    %4 = vector.load %arg3[%c0_5, %c0_6] : memref<1x128xf32, #tpu.memory_space<vmem>>, vector<1x128xf32>
    %5 = vector.broadcast %4 : vector<1x128xf32> to vector<32x128xf32>
    %6 = arith.addf %3, %5 : vector<32x128xf32>
    %cst_7 = arith.constant 0.000000e+00 : f32
    %7 = vector.broadcast %cst_7 : f32 to vector<32x128xf32>
    %8 = arith.maximumf %6, %7 : vector<32x128xf32>
    %9 = arith.truncf %8 : vector<32x128xf32> to vector<32x128xbf16>
    %c0_8 = arith.constant 0 : index
    %c0_9 = arith.constant 0 : index
    %10 = vector.load %arg4[%c0_8, %c0_9] : memref<128x128xbf16, #tpu.memory_space<vmem>>, vector<128x128xbf16>
    %cst_10 = arith.constant dense<0.000000e+00> : vector<32x128xf32>
    %11 = tpu.matmul %9, %10, %cst_10 {dimension_numbers = #tpu.dot_dimension_numbers<[1], [0], [0], [1], [0, 0, 1, 1], [], []>} : vector<32x128xbf16>, vector<128x128xbf16>, vector<32x128xf32> -> vector<32x128xf32>
    %c0_11 = arith.constant 0 : index
    %c0_12 = arith.constant 0 : index
    %12 = vector.load %arg5[%c0_11, %c0_12] : memref<1x128xf32, #tpu.memory_space<vmem>>, vector<1x128xf32>
    %13 = vector.broadcast %12 : vector<1x128xf32> to vector<32x128xf32>
    %14 = arith.addf %11, %13 : vector<32x128xf32>
    %15 = arith.truncf %14 : vector<32x128xf32> to vector<32x128xbf16>
    %c0_13 = arith.constant 0 : index
    %c0_14 = arith.constant 0 : index
    %16 = vector.load %arg6[%c0_13, %c0_14] : memref<128x128xbf16, #tpu.memory_space<vmem>>, vector<128x128xbf16>
    %cst_15 = arith.constant dense<0.000000e+00> : vector<32x128xf32>
    %17 = tpu.matmul %15, %16, %cst_15 {dimension_numbers = #tpu.dot_dimension_numbers<[1], [0], [0], [1], [0, 0, 1, 1], [], []>} : vector<32x128xbf16>, vector<128x128xbf16>, vector<32x128xf32> -> vector<32x128xf32>
    %cst_16 = arith.constant dense<0.000000e+00> : vector<32x128xf32>
    %18 = tpu.matmul %0, %17, %cst_16 {dimension_numbers = #tpu.dot_dimension_numbers<[1], [0], [0], [1], [0, 0, 1, 1], [], []>} : vector<32x32xf32>, vector<32x128xf32>, vector<32x128xf32> -> vector<32x128xf32>
    %c0_17 = arith.constant 0 : index
    %c0_18 = arith.constant 0 : index
    %19 = vector.load %arg7[%c0_17, %c0_18] : memref<1x128xf32, #tpu.memory_space<vmem>>, vector<1x128xf32>
    %20 = vector.broadcast %19 : vector<1x128xf32> to vector<32x128xf32>
    %21 = arith.addf %18, %20 : vector<32x128xf32>
    %cst_19 = arith.constant 0.000000e+00 : f32
    %22 = vector.broadcast %cst_19 : f32 to vector<32x128xf32>
    %23 = arith.maximumf %21, %22 : vector<32x128xf32>
    %24 = arith.truncf %23 : vector<32x128xf32> to vector<32x128xbf16>
    %c0_20 = arith.constant 0 : index
    %c0_21 = arith.constant 0 : index
    %25 = vector.load %arg8[%c0_20, %c0_21] : memref<128x128xbf16, #tpu.memory_space<vmem>>, vector<128x128xbf16>
    %cst_22 = arith.constant dense<0.000000e+00> : vector<32x128xf32>
    %26 = tpu.matmul %24, %25, %cst_22 {dimension_numbers = #tpu.dot_dimension_numbers<[1], [0], [0], [1], [0, 0, 1, 1], [], []>} : vector<32x128xbf16>, vector<128x128xbf16>, vector<32x128xf32> -> vector<32x128xf32>
    %cst_23 = arith.constant dense<0.000000e+00> : vector<32x128xf32>
    %27 = tpu.matmul %0, %26, %cst_23 {dimension_numbers = #tpu.dot_dimension_numbers<[1], [0], [0], [1], [0, 0, 1, 1], [], []>} : vector<32x32xf32>, vector<32x128xf32>, vector<32x128xf32> -> vector<32x128xf32>
    %c0_24 = arith.constant 0 : index
    %c0_25 = arith.constant 0 : index
    %28 = vector.load %arg9[%c0_24, %c0_25] : memref<1x128xf32, #tpu.memory_space<vmem>>, vector<1x128xf32>
    %29 = vector.broadcast %28 : vector<1x128xf32> to vector<32x128xf32>
    %30 = arith.addf %27, %29 : vector<32x128xf32>
    %31 = arith.truncf %30 : vector<32x128xf32> to vector<32x128xbf16>
    %c0_26 = arith.constant 0 : index
    %c0_27 = arith.constant 0 : index
    %32 = vector.load %arg10[%c0_26, %c0_27] : memref<128x128xbf16, #tpu.memory_space<vmem>>, vector<128x128xbf16>
    %cst_28 = arith.constant dense<0.000000e+00> : vector<32x128xf32>
    %33 = tpu.matmul %31, %32, %cst_28 {dimension_numbers = #tpu.dot_dimension_numbers<[1], [0], [0], [1], [0, 0, 1, 1], [], []>} : vector<32x128xbf16>, vector<128x128xbf16>, vector<32x128xf32> -> vector<32x128xf32>
    %c0_29 = arith.constant 0 : index
    %c0_30 = arith.constant 0 : index
    %34 = vector.load %arg11[%c0_29, %c0_30] : memref<1x128xf32, #tpu.memory_space<vmem>>, vector<1x128xf32>
    %35 = vector.broadcast %34 : vector<1x128xf32> to vector<32x128xf32>
    %36 = arith.addf %33, %35 : vector<32x128xf32>
    %cst_31 = arith.constant 0.000000e+00 : f32
    %37 = vector.broadcast %cst_31 : f32 to vector<32x128xf32>
    %38 = arith.cmpf ogt, %36, %37 : vector<32x128xf32>
    %cst_32 = arith.constant 0.000000e+00 : f32
    %39 = vector.broadcast %cst_32 : f32 to vector<32x128xf32>
    %40 = arith.minimumf %36, %39 : vector<32x128xf32>
    %41 = math.exp %40 : vector<32x128xf32>
    %cst_33 = arith.constant 1.000000e+00 : f32
    %42 = vector.broadcast %cst_33 : f32 to vector<32x128xf32>
    %43 = arith.subf %41, %42 : vector<32x128xf32>
    %44 = arith.select %38, %36, %43 : vector<32x128xi1>, vector<32x128xf32>
    %45 = arith.truncf %44 : vector<32x128xf32> to vector<32x128xbf16>
    %c0_34 = arith.constant 0 : index
    %c0_35 = arith.constant 0 : index
    %46 = vector.load %arg12[%c0_34, %c0_35] : memref<128x128xbf16, #tpu.memory_space<vmem>>, vector<128x128xbf16>
    %cst_36 = arith.constant dense<0.000000e+00> : vector<32x128xf32>
    %47 = tpu.matmul %45, %46, %cst_36 {dimension_numbers = #tpu.dot_dimension_numbers<[1], [0], [0], [1], [0, 0, 1, 1], [], []>} : vector<32x128xbf16>, vector<128x128xbf16>, vector<32x128xf32> -> vector<32x128xf32>
    %c0_37 = arith.constant 0 : index
    %c0_38 = arith.constant 0 : index
    %48 = vector.load %arg13[%c0_37, %c0_38] : memref<1x128xf32, #tpu.memory_space<vmem>>, vector<1x128xf32>
    %49 = vector.broadcast %48 : vector<1x128xf32> to vector<32x128xf32>
    %50 = arith.addf %47, %49 : vector<32x128xf32>
    %51 = vector.extract_strided_slice %50 {offsets = [0, 0], sizes = [16, 128], strides = [1, 1]} : vector<32x128xf32> to vector<16x128xf32>
    %52 = vector.extract_strided_slice %50 {offsets = [16, 0], sizes = [16, 128], strides = [1, 1]} : vector<32x128xf32> to vector<16x128xf32>
    %53 = arith.mulf %51, %51 : vector<16x128xf32>
    %cst_39 = arith.constant dense<0.000000e+00> : vector<16xf32>
    %54 = vector.multi_reduction <add>, %53, %cst_39 [1] : vector<16x128xf32> to vector<16xf32>
    %55 = vector.shape_cast %54 : vector<16xf32> to vector<16x1xf32>
    %56 = math.sqrt %55 : vector<16x1xf32>
    %cst_40 = arith.constant 9.99999996E-13 : f32
    %57 = vector.broadcast %cst_40 : f32 to vector<16x1xf32>
    %58 = arith.maximumf %56, %57 : vector<16x1xf32>
    %cst_41 = arith.constant 1.000000e+00 : f32
    %59 = vector.broadcast %cst_41 : f32 to vector<16x1xf32>
    %60 = arith.divf %59, %58 : vector<16x1xf32>
    %61 = arith.mulf %52, %52 : vector<16x128xf32>
    %cst_42 = arith.constant dense<0.000000e+00> : vector<16xf32>
    %62 = vector.multi_reduction <add>, %61, %cst_42 [1] : vector<16x128xf32> to vector<16xf32>
    %63 = vector.shape_cast %62 : vector<16xf32> to vector<16x1xf32>
    %64 = math.sqrt %63 : vector<16x1xf32>
    %cst_43 = arith.constant 9.99999996E-13 : f32
    %65 = vector.broadcast %cst_43 : f32 to vector<16x1xf32>
    %66 = arith.maximumf %64, %65 : vector<16x1xf32>
    %cst_44 = arith.constant 1.000000e+00 : f32
    %67 = vector.broadcast %cst_44 : f32 to vector<16x1xf32>
    %68 = arith.divf %67, %66 : vector<16x1xf32>
    %69 = vector.broadcast %60 : vector<16x1xf32> to vector<16x128xf32>
    %70 = arith.mulf %51, %69 : vector<16x128xf32>
    %71 = vector.broadcast %68 : vector<16x1xf32> to vector<16x128xf32>
    %72 = arith.mulf %52, %71 : vector<16x128xf32>
    %73 = arith.truncf %70 : vector<16x128xf32> to vector<16x128xbf16>
    %74 = arith.truncf %72 : vector<16x128xf32> to vector<16x128xbf16>
    %cst_45 = arith.constant dense<0.000000e+00> : vector<16x16xf32>
    %75 = tpu.matmul %73, %73, %cst_45 {dimension_numbers = #tpu.dot_dimension_numbers<[1], [1], [0], [0], [0, 0, 1, 0], [], []>} : vector<16x128xbf16>, vector<16x128xbf16>, vector<16x16xf32> -> vector<16x16xf32>
    %cst_46 = arith.constant 2.000000e+00 : f32
    %76 = vector.broadcast %cst_46 : f32 to vector<16x16xf32>
    %77 = arith.mulf %75, %76 : vector<16x16xf32>
    %78 = math.exp %77 : vector<16x16xf32>
    %cst_47 = arith.constant dense<0.000000e+00> : vector<16x16xf32>
    %79 = tpu.matmul %74, %74, %cst_47 {dimension_numbers = #tpu.dot_dimension_numbers<[1], [1], [0], [0], [0, 0, 1, 0], [], []>} : vector<16x128xbf16>, vector<16x128xbf16>, vector<16x16xf32> -> vector<16x16xf32>
    %cst_48 = arith.constant 2.000000e+00 : f32
    %80 = vector.broadcast %cst_48 : f32 to vector<16x16xf32>
    %81 = arith.mulf %79, %80 : vector<16x16xf32>
    %82 = math.exp %81 : vector<16x16xf32>
    %cst_49 = arith.constant dense<0.000000e+00> : vector<16x16xf32>
    %83 = tpu.matmul %73, %74, %cst_49 {dimension_numbers = #tpu.dot_dimension_numbers<[1], [1], [0], [0], [0, 0, 1, 0], [], []>} : vector<16x128xbf16>, vector<16x128xbf16>, vector<16x16xf32> -> vector<16x16xf32>
    %cst_50 = arith.constant 2.000000e+00 : f32
    %84 = vector.broadcast %cst_50 : f32 to vector<16x16xf32>
    %85 = arith.mulf %83, %84 : vector<16x16xf32>
    %86 = math.exp %85 : vector<16x16xf32>
    %87 = arith.mulf %70, %72 : vector<16x128xf32>
    %cst_51 = arith.constant dense<0.000000e+00> : vector<16xf32>
    %88 = vector.multi_reduction <add>, %87, %cst_51 [1] : vector<16x128xf32> to vector<16xf32>
    %89 = vector.shape_cast %88 : vector<16xf32> to vector<16x1xf32>
    %cst_52 = arith.constant 2.000000e+00 : f32
    %90 = vector.broadcast %cst_52 : f32 to vector<16x1xf32>
    %91 = arith.mulf %89, %90 : vector<16x1xf32>
    %92 = math.exp %91 : vector<16x1xf32>
    %cst_53 = arith.constant dense<0.000000e+00> : vector<16xf32>
    %93 = vector.multi_reduction <add>, %78, %cst_53 [1] : vector<16x16xf32> to vector<16xf32>
    %94 = vector.shape_cast %93 : vector<16xf32> to vector<16x1xf32>
    %cst_54 = arith.constant dense<0.000000e+00> : vector<16xf32>
    %95 = vector.multi_reduction <add>, %86, %cst_54 [1] : vector<16x16xf32> to vector<16xf32>
    %96 = vector.shape_cast %95 : vector<16xf32> to vector<16x1xf32>
    %cst_55 = arith.constant dense<0.000000e+00> : vector<16xf32>
    %97 = vector.multi_reduction <add>, %82, %cst_55 [0] : vector<16x16xf32> to vector<16xf32>
    %98 = vector.shape_cast %97 : vector<16xf32> to vector<1x16xf32>
    %cst_56 = arith.constant dense<0.000000e+00> : vector<16xf32>
    %99 = vector.multi_reduction <add>, %86, %cst_56 [0] : vector<16x16xf32> to vector<16xf32>
    %100 = vector.shape_cast %99 : vector<16xf32> to vector<1x16xf32>
    %101 = arith.addf %94, %96 : vector<16x1xf32>
    %cst_57 = arith.constant 7.3890562 : f32
    %102 = vector.broadcast %cst_57 : f32 to vector<16x1xf32>
    %103 = arith.subf %101, %102 : vector<16x1xf32>
    %104 = arith.addf %98, %100 : vector<1x16xf32>
    %cst_58 = arith.constant 7.3890562 : f32
    %105 = vector.broadcast %cst_58 : f32 to vector<1x16xf32>
    %106 = arith.subf %104, %105 : vector<1x16xf32>
    %107 = math.log %103 : vector<16x1xf32>
    %cst_59 = arith.constant dense<0.000000e+00> : vector<1xf32>
    %108 = vector.multi_reduction <add>, %107, %cst_59 [0] : vector<16x1xf32> to vector<1xf32>
    %109 = vector.shape_cast %108 : vector<1xf32> to vector<1x1xf32>
    %110 = math.log %106 : vector<1x16xf32>
    %cst_60 = arith.constant dense<0.000000e+00> : vector<1xf32>
    %111 = vector.multi_reduction <add>, %110, %cst_60 [1] : vector<1x16xf32> to vector<1xf32>
    %112 = vector.shape_cast %111 : vector<1xf32> to vector<1x1xf32>
    %113 = math.log %92 : vector<16x1xf32>
    %cst_61 = arith.constant dense<0.000000e+00> : vector<1xf32>
    %114 = vector.multi_reduction <add>, %113, %cst_61 [0] : vector<16x1xf32> to vector<1xf32>
    %115 = vector.shape_cast %114 : vector<1xf32> to vector<1x1xf32>
    %116 = arith.addf %109, %112 : vector<1x1xf32>
    %cst_62 = arith.constant 2.000000e+00 : f32
    %117 = vector.broadcast %cst_62 : f32 to vector<1x1xf32>
    %118 = arith.mulf %117, %115 : vector<1x1xf32>
    %119 = arith.subf %116, %118 : vector<1x1xf32>
    %cst_63 = arith.constant 3.125000e-02 : f32
    %120 = vector.broadcast %cst_63 : f32 to vector<1x1xf32>
    %121 = arith.mulf %119, %120 : vector<1x1xf32>
    %c0_64 = arith.constant 0 : index
    %c0_65 = arith.constant 0 : index
    %122 = vector.load %arg14[%c0_64, %c0_65] : memref<1x1xf32, #tpu.memory_space<vmem>>, vector<1x1xf32>
    tpu.vector_store %arg14[%c0_64, %c0_65], %121 {strides = array<i32>} : memref<1x1xf32, #tpu.memory_space<vmem>>, vector<1x1xf32>,
    return
  }
}

</mosaic_0001>

<llo_original>
// kernel: gscl_pallas.1
$region0: #{gscl_pallas.1}
  #allocation0 [shape = 'u32[]', space=smem, size = 0x4, offset = 0x4, fixed_abs, tag = 'smem constant byte address 0x4 - core index']
  #allocation1 [shape = 'u32[144,128]{1,0:T(1,128)}', space=vmem, size = 0x12000, scoped, tag = 'internal scratch']
  %s0 = inlined_call_operand.hbm [shape: f32[32,32], index: 0, kind: input, shape index: {}]
  %s1 = inlined_call_operand.hbm [shape: bf16[32,128], index: 1, kind: input, shape index: {}]
  %s2 = inlined_call_operand.hbm [shape: bf16[128,128], index: 2, kind: input, shape index: {}]
  %s3 = inlined_call_operand.vmem [shape: f32[1,128], index: 3, kind: input, shape index: {}]
  %s4 = inlined_call_operand.hbm [shape: bf16[128,128], index: 4, kind: input, shape index: {}]
  %s5 = inlined_call_operand.vmem [shape: f32[1,128], index: 5, kind: input, shape index: {}]
  %s6 = inlined_call_operand.hbm [shape: bf16[128,128], index: 6, kind: input, shape index: {}]
  %s7 = inlined_call_operand.vmem [shape: f32[1,128], index: 7, kind: input, shape index: {}]
  %s8 = inlined_call_operand.hbm [shape: bf16[128,128], index: 8, kind: input, shape index: {}]
  %s9 = inlined_call_operand.vmem [shape: f32[1,128], index: 9, kind: input, shape index: {}]
  %s10 = inlined_call_operand.hbm [shape: bf16[128,128], index: 10, kind: input, shape index: {}]
  %s11 = inlined_call_operand.vmem [shape: f32[1,128], index: 11, kind: input, shape index: {}]
  %s12 = inlined_call_operand.hbm [shape: bf16[128,128], index: 12, kind: input, shape index: {}]
  %s13 = inlined_call_operand.vmem [shape: f32[1,128], index: 13, kind: input, shape index: {}]
  %s14 = inlined_call_operand.hbm [shape: f32[1,1], index: 14, kind: output, shape index: {}]
  %s15 = sld [smem:[#allocation0]]
  $region98: #{gscl_pallas.1} parent=0
    _
  %s17 = ssub.s32 1, %s15
  %s18 = scalar_select 0, %s17, %s15
  $region1: #{gscl_pallas.1} parent=0
    #allocation2 [shape = 'u8[16384]{0}', space=vmem, size = 0x4000, scoped, tag = 'input window, operand 0, single buffered']
    #allocation3 [shape = 's32[1]{0}', space=sflag, size = 0x4, scoped, tag = 'scoped memory for gscl_pallas.1']
    #allocation4 [shape = 's32[1]{0}', space=sflag, size = 0x4, scoped, tag = 'scoped memory for gscl_pallas.1']
    #allocation5 [shape = 'u8[8192]{0}', space=vmem, size = 0x2000, scoped, tag = 'input window, operand 1, single buffered']
    #allocation6 [shape = 's32[1]{0}', space=sflag, size = 0x4, scoped, tag = 'scoped memory for gscl_pallas.1']
    #allocation7 [shape = 'u8[32768]{0}', space=vmem, size = 0x8000, scoped, tag = 'input window, operand 2, single buffered']
    #allocation8 [shape = 'u8[32768]{0}', space=vmem, size = 0x8000, scoped, tag = 'input window, operand 4, single buffered']
    #allocation9 [shape = 's32[1]{0}', space=sflag, size = 0x4, scoped, tag = 'scoped memory for gscl_pallas.1']
    #allocation10 [shape = 'u8[32768]{0}', space=vmem, size = 0x8000, scoped, tag = 'input window, operand 6, single buffered']
    #allocation11 [shape = 'u8[32768]{0}', space=vmem, size = 0x8000, scoped, tag = 'input window, operand 8, single buffered']
    #allocation12 [shape = 's32[1]{0}', space=sflag, size = 0x4, scoped, tag = 'scoped memory for gscl_pallas.1']
    #allocation13 [shape = 'u8[32768]{0}', space=vmem, size = 0x8000, scoped, tag = 'input window, operand 10, single buffered']
    #allocation14 [shape = 'u8[32768]{0}', space=vmem, size = 0x8000, scoped, tag = 'input window, operand 12, single buffered']
    #allocation15 [shape = 's32[1]{0}', space=sflag, size = 0x4, scoped, tag = 'scoped memory for gscl_pallas.1']
    #allocation16 [shape = 'u8[512]{0}', space=vmem, size = 0x400, scoped, tag = 'output window, operand 0, single buffered']
    %19 = vsyncpa [#allocation3], 0
    %20 = vsyncpa [#allocation6], 0
    %21 = vsyncpa [#allocation9], 0
    %22 = vsyncpa [#allocation12], 0
    %23 = vsyncpa [#allocation15], 0
    %24 = vsyncpa [#allocation4], 0
    // Predicated region
    $region2: #{gscl_pallas.1} parent=1 // pred_check
      _
    $region3: #{gscl_pallas.1} parent=1 // pred_check_branch
      %26 = sbr.rel (0) target = $region5
    $region4: #{gscl_pallas.1} parent=1 // pred_region
      %s28 = ssub.s32 512, 512
      %29 = vsyncadd [#allocation3], %s28
      %s30 = sshll.u32 [#allocation2], 4
      %s31 = int_to_ptr.vmem [resolvable:$true] %s30
      %36 = dma.hbm_to_vmem [thread:$0]  %s0, 512, %s31, [#allocation3], 128, 128, 8
    $region5: #{gscl_pallas.1} parent=1 // pred_fallthru
      _
    // Predicated region
    $region6: #{gscl_pallas.1} parent=1 // pred_check
      _
    $region7: #{gscl_pallas.1} parent=1 // pred_check_branch
      %38 = sbr.rel (0) target = $region9
    $region8: #{gscl_pallas.1} parent=1 // pred_region
      %s40 = ssub.s32 256, 256
      %41 = vsyncadd [#allocation6], %s40
      %s42 = sshll.u32 [#allocation5], 4
      %s43 = int_to_ptr.vmem [resolvable:$true] %s42
      %48 = dma.hbm_to_vmem [thread:$0]  %s1, 256, %s43, [#allocation6], 64, 64, 4
    $region9: #{gscl_pallas.1} parent=1 // pred_fallthru
      _
    // Predicated region
    $region10: #{gscl_pallas.1} parent=1 // pred_check
      _
    $region11: #{gscl_pallas.1} parent=1 // pred_check_branch
      %50 = sbr.rel (0) target = $region13
    $region12: #{gscl_pallas.1} parent=1 // pred_region
      %s52 = ssub.s32 1024, 1024
      %53 = vsyncadd [#allocation6], %s52
      %s54 = sshll.u32 [#allocation7], 4
      %s55 = int_to_ptr.vmem [resolvable:$true] %s54
      %60 = dma.hbm_to_vmem [thread:$0]  %s2, 1024, %s55, [#allocation6], 64, 64, 4
    $region13: #{gscl_pallas.1} parent=1 // pred_fallthru
      _
    // Predicated region
    $region14: #{gscl_pallas.1} parent=1 // pred_check
      _
    $region15: #{gscl_pallas.1} parent=1 // pred_check_branch
      %62 = sbr.rel (0) target = $region17
    $region16: #{gscl_pallas.1} parent=1 // pred_region
      _
    $region17: #{gscl_pallas.1} parent=1 // pred_fallthru
      _
    // Predicated region
    $region18: #{gscl_pallas.1} parent=1 // pred_check
      _
    $region19: #{gscl_pallas.1} parent=1 // pred_check_branch
      %64 = sbr.rel (0) target = $region21
    $region20: #{gscl_pallas.1} parent=1 // pred_region
      %s66 = ssub.s32 1024, 1024
      %67 = vsyncadd [#allocation9], %s66
      %s68 = sshll.u32 [#allocation8], 4
      %s69 = int_to_ptr.vmem [resolvable:$true] %s68
      %74 = dma.hbm_to_vmem [thread:$0]  %s4, 1024, %s69, [#allocation9], 64, 64, 4
    $region21: #{gscl_pallas.1} parent=1 // pred_fallthru
      _
    // Predicated region
    $region22: #{gscl_pallas.1} parent=1 // pred_check
      _
    $region23: #{gscl_pallas.1} parent=1 // pred_check_branch
      %76 = sbr.rel (0) target = $region25
    $region24: #{gscl_pallas.1} parent=1 // pred_region
      _
    $region25: #{gscl_pallas.1} parent=1 // pred_fallthru
      _
    // Predicated region
    $region26: #{gscl_pallas.1} parent=1 // pred_check
      _
    $region27: #{gscl_pallas.1} parent=1 // pred_check_branch
      %78 = sbr.rel (0) target = $region29
    $region28: #{gscl_pallas.1} parent=1 // pred_region
      %s80 = ssub.s32 1024, 1024
      %81 = vsyncadd [#allocation9], %s80
      %s82 = sshll.u32 [#allocation10], 4
      %s83 = int_to_ptr.vmem [resolvable:$true] %s82
      %88 = dma.hbm_to_vmem [thread:$0]  %s6, 1024, %s83, [#allocation9], 64, 64, 4
    $region29: #{gscl_pallas.1} parent=1 // pred_fallthru
      _
    // Predicated region
    $region30: #{gscl_pallas.1} parent=1 // pred_check
      _
    $region31: #{gscl_pallas.1} parent=1 // pred_check_branch
      %90 = sbr.rel (0) target = $region33
    $region32: #{gscl_pallas.1} parent=1 // pred_region
      _
    $region33: #{gscl_pallas.1} parent=1 // pred_fallthru
      _
    // Predicated region
    $region34: #{gscl_pallas.1} parent=1 // pred_check
      _
    $region35: #{gscl_pallas.1} parent=1 // pred_check_branch
      %92 = sbr.rel (0) target = $region37
    $region36: #{gscl_pallas.1} parent=1 // pred_region
      %s94 = ssub.s32 1024, 1024
      %95 = vsyncadd [#allocation12], %s94
      %s96 = sshll.u32 [#allocation11], 4
      %s97 = int_to_ptr.vmem [resolvable:$true] %s96
      %102 = dma.hbm_to_vmem [thread:$0]  %s8, 1024, %s97, [#allocation12], 64, 64, 4
    $region37: #{gscl_pallas.1} parent=1 // pred_fallthru
      _
    // Predicated region
    $region38: #{gscl_pallas.1} parent=1 // pred_check
      _
    $region39: #{gscl_pallas.1} parent=1 // pred_check_branch
      %104 = sbr.rel (0) target = $region41
    $region40: #{gscl_pallas.1} parent=1 // pred_region
      _
    $region41: #{gscl_pallas.1} parent=1 // pred_fallthru
      _
    // Predicated region
    $region42: #{gscl_pallas.1} parent=1 // pred_check
      _
    $region43: #{gscl_pallas.1} parent=1 // pred_check_branch
      %106 = sbr.rel (0) target = $region45
    $region44: #{gscl_pallas.1} parent=1 // pred_region
      %s108 = ssub.s32 1024, 1024
      %109 = vsyncadd [#allocation12], %s108
      %s110 = sshll.u32 [#allocation13], 4
      %s111 = int_to_ptr.vmem [resolvable:$true] %s110
      %116 = dma.hbm_to_vmem [thread:$0]  %s10, 1024, %s111, [#allocation12], 64, 64, 4
    $region45: #{gscl_pallas.1} parent=1 // pred_fallthru
      _
    // Predicated region
    $region46: #{gscl_pallas.1} parent=1 // pred_check
      _
    $region47: #{gscl_pallas.1} parent=1 // pred_check_branch
      %118 = sbr.rel (0) target = $region49
    $region48: #{gscl_pallas.1} parent=1 // pred_region
      _
    $region49: #{gscl_pallas.1} parent=1 // pred_fallthru
      _
    // Predicated region
    $region50: #{gscl_pallas.1} parent=1 // pred_check
      _
    $region51: #{gscl_pallas.1} parent=1 // pred_check_branch
      %120 = sbr.rel (0) target = $region53
    $region52: #{gscl_pallas.1} parent=1 // pred_region
      %s122 = ssub.s32 1024, 1024
      %123 = vsyncadd [#allocation15], %s122
      %s124 = sshll.u32 [#allocation14], 4
      %s125 = int_to_ptr.vmem [resolvable:$true] %s124
      %130 = dma.hbm_to_vmem [thread:$0]  %s12, 1024, %s125, [#allocation15], 64, 64, 4
    $region53: #{gscl_pallas.1} parent=1 // pred_fallthru
      _
    // Predicated region
    $region54: #{gscl_pallas.1} parent=1 // pred_check
      _
    $region55: #{gscl_pallas.1} parent=1 // pred_check_branch
      %132 = sbr.rel (0) target = $region57
    $region56: #{gscl_pallas.1} parent=1 // pred_region
      _
    $region57: #{gscl_pallas.1} parent=1 // pred_fallthru
      _
    // Predicated region
    $region58: #{gscl_pallas.1} parent=1 // pred_check
      _
    $region59: #{gscl_pallas.1} parent=1 // pred_check_branch
      %134 = sbr.rel (0) target = $region61
    $region60: #{gscl_pallas.1} parent=1 // pred_region
      %135 = dma.done [#allocation3], 512
    $region61: #{gscl_pallas.1} parent=1 // pred_fallthru
      _
    // Predicated region
    $region62: #{gscl_pallas.1} parent=1 // pred_check
      _
    $region63: #{gscl_pallas.1} parent=1 // pred_check_branch
      %137 = sbr.rel (0) target = $region65
    $region64: #{gscl_pallas.1} parent=1 // pred_region
      %138 = dma.done [#allocation6], 256
    $region65: #{gscl_pallas.1} parent=1 // pred_fallthru
      _
    // Predicated region
    $region66: #{gscl_pallas.1} parent=1 // pred_check
      _
    $region67: #{gscl_pallas.1} parent=1 // pred_check_branch
      %140 = sbr.rel (0) target = $region69
    $region68: #{gscl_pallas.1} parent=1 // pred_region
      %141 = dma.done [#allocation6], 1024
    $region69: #{gscl_pallas.1} parent=1 // pred_fallthru
      _
    // Predicated region
    $region70: #{gscl_pallas.1} parent=1 // pred_check
      _
    $region71: #{gscl_pallas.1} parent=1 // pred_check_branch
      %143 = sbr.rel (0) target = $region73
    $region72: #{gscl_pallas.1} parent=1 // pred_region
      %144 = dma.done [#allocation9], 1024
    $region73: #{gscl_pallas.1} parent=1 // pred_fallthru
      _
    // Predicated region
    $region74: #{gscl_pallas.1} parent=1 // pred_check
      _
    $region75: #{gscl_pallas.1} parent=1 // pred_check_branch
      %146 = sbr.rel (0) target = $region77
    $region76: #{gscl_pallas.1} parent=1 // pred_region
      %147 = dma.done [#allocation9], 1024
    $region77: #{gscl_pallas.1} parent=1 // pred_fallthru
      _
    // Predicated region
    $region78: #{gscl_pallas.1} parent=1 // pred_check
      _
    $region79: #{gscl_pallas.1} parent=1 // pred_check_branch
      %149 = sbr.rel (0) target = $region81
    $region80: #{gscl_pallas.1} parent=1 // pred_region
      %150 = dma.done [#allocation12], 1024
    $region81: #{gscl_pallas.1} parent=1 // pred_fallthru
      _
    // Predicated region
    $region82: #{gscl_pallas.1} parent=1 // pred_check
      _
    $region83: #{gscl_pallas.1} parent=1 // pred_check_branch
      %152 = sbr.rel (0) target = $region85
    $region84: #{gscl_pallas.1} parent=1 // pred_region
      %153 = dma.done [#allocation12], 1024
    $region85: #{gscl_pallas.1} parent=1 // pred_fallthru
      _
    // Predicated region
    $region86: #{gscl_pallas.1} parent=1 // pred_check
      _
    $region87: #{gscl_pallas.1} parent=1 // pred_check_branch
      %155 = sbr.rel (0) target = $region89
    $region88: #{gscl_pallas.1} parent=1 // pred_region
      %156 = dma.done [#allocation15], 1024
    $region89: #{gscl_pallas.1} parent=1 // pred_fallthru
      _
    %v158 = vld [vmem:[#allocation2] sm:$0xff]
    %v159 = vld [vmem:[#allocation2 + $0x8] sm:$0xff]
    %v160 = vld [vmem:[#allocation2 + $0x10] sm:$0xff]
    %v161 = vld [vmem:[#allocation2 + $0x18] sm:$0xff]
    %v162 = vld [vmem:[#allocation5] sm:$0xf]
    %v163 = vld [vmem:[#allocation5 + $0x4] sm:$0xf]
    %v164 = vld [vmem:[#allocation5 + $0x8] sm:$0xf]
    %v165 = vld [vmem:[#allocation5 + $0xc] sm:$0xf]
    %v166 = vld [vmem:[#allocation7] sm:$0xf]
    %v167 = vld [vmem:[#allocation7 + $0x4] sm:$0xf]
    %v168 = vld [vmem:[#allocation7 + $0x8] sm:$0xf]
    %v169 = vld [vmem:[#allocation7 + $0xc] sm:$0xf]
    %v170 = vld [vmem:[#allocation7 + $0x10] sm:$0xf]
    %v171 = vld [vmem:[#allocation7 + $0x14] sm:$0xf]
    %v172 = vld [vmem:[#allocation7 + $0x18] sm:$0xf]
    %v173 = vld [vmem:[#allocation7 + $0x1c] sm:$0xf]
    %v174 = vld [vmem:[#allocation7 + $0x20] sm:$0xf]
    %v175 = vld [vmem:[#allocation7 + $0x24] sm:$0xf]
    %v176 = vld [vmem:[#allocation7 + $0x28] sm:$0xf]
    %v177 = vld [vmem:[#allocation7 + $0x2c] sm:$0xf]
    %v178 = vld [vmem:[#allocation7 + $0x30] sm:$0xf]
    %v179 = vld [vmem:[#allocation7 + $0x34] sm:$0xf]
    %v180 = vld [vmem:[#allocation7 + $0x38] sm:$0xf]
    %v181 = vld [vmem:[#allocation7 + $0x3c] sm:$0xf]
    %v182 = vld [vmem:[%s3] sm:$0x1]
    %v184 = vlaneseq
    %v185 = vshrl.u32 %v184, 7
    %v186 = vsub.s32 0, %v185
    %v187 = vrot.slane %v182, %v186
    %v193 = vunpack.c.l.b16 %v162
    %v194 = vunpack.c.l.b16 %v163
    %v195 = vunpack.c.l.b16 %v164
    %v196 = vunpack.c.l.b16 %v165
    %v197 = vpack.c.b16 %v194, %v193
    %v198 = vpack.c.b16 %v196, %v195
    %v217 = vunpack.c.l.b16 %v166
    %v218 = vunpack.c.l.b16 %v167
    %v219 = vunpack.c.l.b16 %v168
    %v220 = vunpack.c.l.b16 %v169
    %v221 = vunpack.c.l.b16 %v170
    %v222 = vunpack.c.l.b16 %v171
    %v223 = vunpack.c.l.b16 %v172
    %v224 = vunpack.c.l.b16 %v173
    %v225 = vunpack.c.l.b16 %v174
    %v226 = vunpack.c.l.b16 %v175
    %v227 = vunpack.c.l.b16 %v176
    %v228 = vunpack.c.l.b16 %v177
    %v229 = vunpack.c.l.b16 %v178
    %v230 = vunpack.c.l.b16 %v179
    %v231 = vunpack.c.l.b16 %v180
    %v232 = vunpack.c.l.b16 %v181
    %v233 = vpack.c.b16 %v218, %v217
    %v234 = vpack.c.b16 %v220, %v219
    %v235 = vpack.c.b16 %v222, %v221
    %v236 = vpack.c.b16 %v224, %v223
    %v237 = vpack.c.b16 %v226, %v225
    %v238 = vpack.c.b16 %v228, %v227
    %v239 = vpack.c.b16 %v230, %v229
    %v240 = vpack.c.b16 %v232, %v231
    %249 = vmatprep.subr.bf16.mxu0 0
    %250 = vmatpush1.bf16.msra.mxu0 %v240
    %251 = vmatprep.subr.bf16.mxu0 0
    %252 = vmatpush1.bf16.msra.mxu0 %v239
    %253 = vmatprep.subr.bf16.mxu0 0
    %254 = vmatpush1.bf16.msra.mxu0 %v238
    %255 = vmatprep.subr.bf16.mxu0 0
    %256 = vmatpush1.bf16.msra.mxu0 %v237
    %257 = vmatprep.subr.bf16.mxu0 0
    %258 = vmatpush1.bf16.msra.mxu0 %v236
    %259 = vmatprep.subr.bf16.mxu0 0
    %260 = vmatpush1.bf16.msra.mxu0 %v235
    %261 = vmatprep.subr.bf16.mxu0 0
    %262 = vmatpush1.bf16.msra.mxu0 %v234
    %263 = vmatprep.subr.bf16.mxu0 0
    %264 = vmatpush1.bf16.msra.mxu0 %v233
    %265 = vmatprep.subr.bf16.mxu0 0
    %266 = vmatpush2.bf16.msra.mxu0 0
    %267 = vmatprep.subr.bf16.mxu0 0
    %268 = vmatpush2.bf16.msra.mxu0 0
    %269 = vmatprep.subr.bf16.mxu0 0
    %270 = vmatpush2.bf16.msra.mxu0 0
    %271 = vmatprep.subr.bf16.mxu0 0
    %272 = vmatpush2.bf16.msra.mxu0 0
    %273 = vmatprep.subr.bf16.mxu0 0
    %274 = vmatpush2.bf16.msra.mxu0 0
    %275 = vmatprep.subr.bf16.mxu0 0
    %276 = vmatpush2.bf16.msra.mxu0 0
    %277 = vmatprep.subr.bf16.mxu0 0
    %278 = vmatpush2.bf16.msra.mxu0 0
    %279 = vmatprep.subr.bf16.mxu0 0
    %280 = vmatpush2.bf16.msra.mxu0 0
    %281 = vmatprep.mubr.bf16.mxu0 0
    %282 = vmatmul.mubr.bf16.gmra.mxu0 %v197
    %v283 = vpop.f32.mrf.mxu0
    %v284 = vadd.f32 %v187, %v283
    %v285 = vpop.f32.mrf.mxu0
    %v286 = vpop.f32.mrf.mxu0
    %v287 = vadd.f32 %v187, %v286
    %v288 = vpop.f32.mrf.mxu0
    %289 = vmatprep.mubr.bf16.mxu0 0
    %290 = vmatmul.mubr.bf16.gmra.mxu0 %v198
    %v291 = vpop.f32.mrf.mxu0
    %v292 = vadd.f32 %v187, %v291
    %v293 = vpop.f32.mrf.mxu0
    %v294 = vpop.f32.mrf.mxu0
    %v295 = vadd.f32 %v187, %v294
    %v296 = vpop.f32.mrf.mxu0
    %297 = vdwg.mxu0
    %v298 = vmax.f32 %v284, 0.0
    %v299 = vmax.f32 %v287, 0.0
    %v300 = vmax.f32 %v292, 0.0
    %v301 = vmax.f32 %v295, 0.0
    %v302 = vpack.c.bf16 %v299, %v298
    %v303 = vpack.c.bf16 %v301, %v300
    %v304 = vld [vmem:[#allocation8] sm:$0xf]
    %v305 = vld [vmem:[#allocation8 + $0x4] sm:$0xf]
    %v306 = vld [vmem:[#allocation8 + $0x8] sm:$0xf]
    %v307 = vld [vmem:[#allocation8 + $0xc] sm:$0xf]
    %v308 = vld [vmem:[#allocation8 + $0x10] sm:$0xf]
    %v309 = vld [vmem:[#allocation8 + $0x14] sm:$0xf]
    %v310 = vld [vmem:[#allocation8 + $0x18] sm:$0xf]
    %v311 = vld [vmem:[#allocation8 + $0x1c] sm:$0xf]
    %v312 = vld [vmem:[#allocation8 + $0x20] sm:$0xf]
    %v313 = vld [vmem:[#allocation8 + $0x24] sm:$0xf]
    %v314 = vld [vmem:[#allocation8 + $0x28] sm:$0xf]
    %v315 = vld [vmem:[#allocation8 + $0x2c] sm:$0xf]
    %v316 = vld [vmem:[#allocation8 + $0x30] sm:$0xf]
    %v317 = vld [vmem:[#allocation8 + $0x34] sm:$0xf]
    %v318 = vld [vmem:[#allocation8 + $0x38] sm:$0xf]
    %v319 = vld [vmem:[#allocation8 + $0x3c] sm:$0xf]
    %v320 = vld [vmem:[%s5] sm:$0x1]
    %v322 = vlaneseq
    %v323 = vshrl.u32 %v322, 7
    %v324 = vsub.s32 0, %v323
    %v325 = vrot.slane %v320, %v324
    %v343 = vunpack.c.l.b16 %v304
    %v344 = vunpack.c.l.b16 %v305
    %v345 = vunpack.c.l.b16 %v306
    %v346 = vunpack.c.l.b16 %v307
    %v347 = vunpack.c.l.b16 %v308
    %v348 = vunpack.c.l.b16 %v309
    %v349 = vunpack.c.l.b16 %v310
    %v350 = vunpack.c.l.b16 %v311
    %v351 = vunpack.c.l.b16 %v312
    %v352 = vunpack.c.l.b16 %v313
    %v353 = vunpack.c.l.b16 %v314
    %v354 = vunpack.c.l.b16 %v315
    %v355 = vunpack.c.l.b16 %v316
    %v356 = vunpack.c.l.b16 %v317
    %v357 = vunpack.c.l.b16 %v318
    %v358 = vunpack.c.l.b16 %v319
    %v359 = vpack.c.b16 %v344, %v343
    %v360 = vpack.c.b16 %v346, %v345
    %v361 = vpack.c.b16 %v348, %v347
    %v362 = vpack.c.b16 %v350, %v349
    %v363 = vpack.c.b16 %v352, %v351
    %v364 = vpack.c.b16 %v354, %v353
    %v365 = vpack.c.b16 %v356, %v355
    %v366 = vpack.c.b16 %v358, %v357
    %375 = vmatprep.subr.bf16.mxu0 0
    %376 = vmatpush1.bf16.msra.mxu0 %v366
    %377 = vmatprep.subr.bf16.mxu0 0
    %378 = vmatpush1.bf16.msra.mxu0 %v365
    %379 = vmatprep.subr.bf16.mxu0 0
    %380 = vmatpush1.bf16.msra.mxu0 %v364
    %381 = vmatprep.subr.bf16.mxu0 0
    %382 = vmatpush1.bf16.msra.mxu0 %v363
    %383 = vmatprep.subr.bf16.mxu0 0
    %384 = vmatpush1.bf16.msra.mxu0 %v362
    %385 = vmatprep.subr.bf16.mxu0 0
    %386 = vmatpush1.bf16.msra.mxu0 %v361
    %387 = vmatprep.subr.bf16.mxu0 0
    %388 = vmatpush1.bf16.msra.mxu0 %v360
    %389 = vmatprep.subr.bf16.mxu0 0
    %390 = vmatpush1.bf16.msra.mxu0 %v359
    %391 = vmatprep.subr.bf16.mxu0 0
    %392 = vmatpush2.bf16.msra.mxu0 0
    %393 = vmatprep.subr.bf16.mxu0 0
    %394 = vmatpush2.bf16.msra.mxu0 0
    %395 = vmatprep.subr.bf16.mxu0 0
    %396 = vmatpush2.bf16.msra.mxu0 0
    %397 = vmatprep.subr.bf16.mxu0 0
    %398 = vmatpush2.bf16.msra.mxu0 0
    %399 = vmatprep.subr.bf16.mxu0 0
    %400 = vmatpush2.bf16.msra.mxu0 0
    %401 = vmatprep.subr.bf16.mxu0 0
    %402 = vmatpush2.bf16.msra.mxu0 0
    %403 = vmatprep.subr.bf16.mxu0 0
    %404 = vmatpush2.bf16.msra.mxu0 0
    %405 = vmatprep.subr.bf16.mxu0 0
    %406 = vmatpush2.bf16.msra.mxu0 0
    %407 = vmatprep.mubr.bf16.mxu0 0
    %408 = vmatmul.mubr.bf16.gmra.mxu0 %v302
    %v409 = vpop.f32.mrf.mxu0
    %v410 = vadd.f32 %v325, %v409
    %v411 = vpop.f32.mrf.mxu0
    %v412 = vpop.f32.mrf.mxu0
    %v413 = vadd.f32 %v325, %v412
    %v414 = vpop.f32.mrf.mxu0
    %415 = vmatprep.mubr.bf16.mxu0 0
    %416 = vmatmul.mubr.bf16.gmra.mxu0 %v303
    %v417 = vpop.f32.mrf.mxu0
    %v418 = vadd.f32 %v325, %v417
    %v419 = vpop.f32.mrf.mxu0
    %v420 = vpop.f32.mrf.mxu0
    %v421 = vadd.f32 %v325, %v420
    %v422 = vpop.f32.mrf.mxu0
    %423 = vdwg.mxu0
    %v424 = vpack.c.bf16 %v413, %v410
    %v425 = vpack.c.bf16 %v421, %v418
    %v426 = vld [vmem:[#allocation10] sm:$0xf]
    %v427 = vld [vmem:[#allocation10 + $0x4] sm:$0xf]
    %v428 = vld [vmem:[#allocation10 + $0x8] sm:$0xf]
    %v429 = vld [vmem:[#allocation10 + $0xc] sm:$0xf]
    %v430 = vld [vmem:[#allocation10 + $0x10] sm:$0xf]
    %v431 = vld [vmem:[#allocation10 + $0x14] sm:$0xf]
    %v432 = vld [vmem:[#allocation10 + $0x18] sm:$0xf]
    %v433 = vld [vmem:[#allocation10 + $0x1c] sm:$0xf]
    %v434 = vld [vmem:[#allocation10 + $0x20] sm:$0xf]
    %v435 = vld [vmem:[#allocation10 + $0x24] sm:$0xf]
    %v436 = vld [vmem:[#allocation10 + $0x28] sm:$0xf]
    %v437 = vld [vmem:[#allocation10 + $0x2c] sm:$0xf]
    %v438 = vld [vmem:[#allocation10 + $0x30] sm:$0xf]
    %v439 = vld [vmem:[#allocation10 + $0x34] sm:$0xf]
    %v440 = vld [vmem:[#allocation10 + $0x38] sm:$0xf]
    %v441 = vld [vmem:[#allocation10 + $0x3c] sm:$0xf]
    %v458 = vunpack.c.l.b16 %v426
    %v459 = vunpack.c.l.b16 %v427
    %v460 = vunpack.c.l.b16 %v428
    %v461 = vunpack.c.l.b16 %v429
    %v462 = vunpack.c.l.b16 %v430
    %v463 = vunpack.c.l.b16 %v431
    %v464 = vunpack.c.l.b16 %v432
    %v465 = vunpack.c.l.b16 %v433
    %v466 = vunpack.c.l.b16 %v434
    %v467 = vunpack.c.l.b16 %v435
    %v468 = vunpack.c.l.b16 %v436
    %v469 = vunpack.c.l.b16 %v437
    %v470 = vunpack.c.l.b16 %v438
    %v471 = vunpack.c.l.b16 %v439
    %v472 = vunpack.c.l.b16 %v440
    %v473 = vunpack.c.l.b16 %v441
    %v474 = vpack.c.b16 %v459, %v458
    %v475 = vpack.c.b16 %v461, %v460
    %v476 = vpack.c.b16 %v463, %v462
    %v477 = vpack.c.b16 %v465, %v464
    %v478 = vpack.c.b16 %v467, %v466
    %v479 = vpack.c.b16 %v469, %v468
    %v480 = vpack.c.b16 %v471, %v470
    %v481 = vpack.c.b16 %v473, %v472
    %490 = vmatprep.subr.bf16.mxu0 0
    %491 = vmatpush1.bf16.msra.mxu0 %v481
    %492 = vmatprep.subr.bf16.mxu0 0
    %493 = vmatpush1.bf16.msra.mxu0 %v480
    %494 = vmatprep.subr.bf16.mxu0 0
    %495 = vmatpush1.bf16.msra.mxu0 %v479
    %496 = vmatprep.subr.bf16.mxu0 0
    %497 = vmatpush1.bf16.msra.mxu0 %v478
    %498 = vmatprep.subr.bf16.mxu0 0
    %499 = vmatpush1.bf16.msra.mxu0 %v477
    %500 = vmatprep.subr.bf16.mxu0 0
    %501 = vmatpush1.bf16.msra.mxu0 %v476
    %502 = vmatprep.subr.bf16.mxu0 0
    %503 = vmatpush1.bf16.msra.mxu0 %v475
    %504 = vmatprep.subr.bf16.mxu0 0
    %505 = vmatpush1.bf16.msra.mxu0 %v474
    %506 = vmatprep.subr.bf16.mxu0 0
    %507 = vmatpush2.bf16.msra.mxu0 0
    %508 = vmatprep.subr.bf16.mxu0 0
    %509 = vmatpush2.bf16.msra.mxu0 0
    %510 = vmatprep.subr.bf16.mxu0 0
    %511 = vmatpush2.bf16.msra.mxu0 0
    %512 = vmatprep.subr.bf16.mxu0 0
    %513 = vmatpush2.bf16.msra.mxu0 0
    %514 = vmatprep.subr.bf16.mxu0 0
    %515 = vmatpush2.bf16.msra.mxu0 0
    %516 = vmatprep.subr.bf16.mxu0 0
    %517 = vmatpush2.bf16.msra.mxu0 0
    %518 = vmatprep.subr.bf16.mxu0 0
    %519 = vmatpush2.bf16.msra.mxu0 0
    %520 = vmatprep.subr.bf16.mxu0 0
    %521 = vmatpush2.bf16.msra.mxu0 0
    %522 = vmatprep.mubr.bf16.mxu0 0
    %523 = vmatmul.mubr.bf16.gmra.mxu0 %v424
    %v524 = vpop.f32.mrf.mxu0
    %v525 = vadd.f32 0.0, %v524
    %v526 = vpop.f32.mrf.mxu0
    %v527 = vpop.f32.mrf.mxu0
    %v528 = vadd.f32 0.0, %v527
    %v529 = vpop.f32.mrf.mxu0
    %530 = vmatprep.mubr.bf16.mxu0 0
    %531 = vmatmul.mubr.bf16.gmra.mxu0 %v425
    %v532 = vpop.f32.mrf.mxu0
    %v533 = vadd.f32 0.0, %v532
    %v534 = vpop.f32.mrf.mxu0
    %v535 = vpop.f32.mrf.mxu0
    %v536 = vadd.f32 0.0, %v535
    %v537 = vpop.f32.mrf.mxu0
    %538 = vdwg.mxu0
    %v539 = vld [vmem:[%s7] sm:$0x1]
    %v541 = vlaneseq
    %v542 = vshrl.u32 %v541, 7
    %v543 = vsub.s32 0, %v542
    %v544 = vrot.slane %v539, %v543
    %vm546 = vcmask 261120
    %v548 = vsel %vm546, %v158, 0
    %v551 = vsel %vm546, %v159, 0
    %v554 = vsel %vm546, %v160, 0
    %v557 = vsel %vm546, %v161, 0
    %559 = vmatprep.subr.mxu0 0.0
    %560 = vmatpush1.msra.mxu0 0.0
    %561 = vmatprep.subr.mxu0 0.0
    %562 = vmatpush1.msra.mxu0 0.0
    %563 = vmatprep.subr.mxu0 0.0
    %564 = vmatpush1.msra.mxu0 0.0
    %565 = vmatprep.subr.mxu0 0.0
    %566 = vmatpush1.msra.mxu0 0.0
    %567 = vmatprep.subr.mxu0 0.0
    %568 = vmatpush1.msra.mxu0 0.0
    %569 = vmatprep.subr.mxu0 0.0
    %570 = vmatpush1.msra.mxu0 0.0
    %571 = vmatprep.subr.mxu0 0.0
    %572 = vmatpush1.msra.mxu0 0.0
    %573 = vmatprep.subr.mxu0 0.0
    %574 = vmatpush1.msra.mxu0 0.0
    %575 = vmatprep.subr.mxu0 0.0
    %576 = vmatpush1.msra.mxu0 0.0
    %577 = vmatprep.subr.mxu0 0.0
    %578 = vmatpush1.msra.mxu0 0.0
    %579 = vmatprep.subr.mxu0 0.0
    %580 = vmatpush1.msra.mxu0 0.0
    %581 = vmatprep.subr.mxu0 0.0
    %582 = vmatpush1.msra.mxu0 0.0
    %583 = vmatprep.subr.mxu0 0.0
    %584 = vmatpush1.msra.mxu0 %v536
    %585 = vmatprep.subr.mxu0 0.0
    %586 = vmatpush1.msra.mxu0 %v533
    %587 = vmatprep.subr.mxu0 0.0
    %588 = vmatpush1.msra.mxu0 %v528
    %589 = vmatprep.subr.mxu0 0.0
    %590 = vmatpush1.msra.mxu0 %v525
    %591 = vmatprep.subr.mxu0 0.0
    %592 = vmatpush2.msra.mxu0 0.0
    %593 = vmatprep.subr.mxu0 0.0
    %594 = vmatpush2.msra.mxu0 0.0
    %595 = vmatprep.subr.mxu0 0.0
    %596 = vmatpush2.msra.mxu0 0.0
    %597 = vmatprep.subr.mxu0 0.0
    %598 = vmatpush2.msra.mxu0 0.0
    %599 = vmatprep.subr.mxu0 0.0
    %600 = vmatpush2.msra.mxu0 0.0
    %601 = vmatprep.subr.mxu0 0.0
    %602 = vmatpush2.msra.mxu0 0.0
    %603 = vmatprep.subr.mxu0 0.0
    %604 = vmatpush2.msra.mxu0 0.0
    %605 = vmatprep.subr.mxu0 0.0
    %606 = vmatpush2.msra.mxu0 0.0
    %607 = vmatprep.subr.mxu0 0.0
    %608 = vmatpush2.msra.mxu0 0.0
    %609 = vmatprep.subr.mxu0 0.0
    %610 = vmatpush2.msra.mxu0 0.0
    %611 = vmatprep.subr.mxu0 0.0
    %612 = vmatpush2.msra.mxu0 0.0
    %613 = vmatprep.subr.mxu0 0.0
    %614 = vmatpush2.msra.mxu0 0.0
    %615 = vmatprep.subr.mxu0 0.0
    %616 = vmatpush2.msra.mxu0 0.0
    %617 = vmatprep.subr.mxu0 0.0
    %618 = vmatpush2.msra.mxu0 0.0
    %619 = vmatprep.subr.mxu0 0.0
    %620 = vmatpush2.msra.mxu0 0.0
    %621 = vmatprep.subr.mxu0 0.0
    %622 = vmatpush2.msra.mxu0 0.0
    %623 = vmatprep.mubr.f32.mxu0 0.0
    %624 = vmatmul.mubr.f32.gmra.mxu0 %v548
    %v625 = vpop.f32.mrf.mxu0
    %v626 = vadd.f32 %v544, %v625
    %v627 = vpop.f32.mrf.mxu0
    %628 = vmatprep.mubr.f32.mxu0 0.0
    %629 = vmatmul.mubr.f32.gmra.mxu0 %v551
    %v630 = vpop.f32.mrf.mxu0
    %v631 = vadd.f32 %v544, %v630
    %v632 = vpop.f32.mrf.mxu0
    %633 = vmatprep.mubr.f32.mxu0 0.0
    %634 = vmatmul.mubr.f32.gmra.mxu0 %v554
    %v635 = vpop.f32.mrf.mxu0
    %v636 = vadd.f32 %v544, %v635
    %v637 = vpop.f32.mrf.mxu0
    %638 = vmatprep.mubr.f32.mxu0 0.0
    %639 = vmatmul.mubr.f32.gmra.mxu0 %v557
    %v640 = vpop.f32.mrf.mxu0
    %v641 = vadd.f32 %v544, %v640
    %v642 = vpop.f32.mrf.mxu0
    %643 = vdwg.mxu0
    %v644 = vmax.f32 %v626, 0.0
    %v645 = vmax.f32 %v631, 0.0
    %v646 = vmax.f32 %v636, 0.0
    %v647 = vmax.f32 %v641, 0.0
    %v648 = vpack.c.bf16 %v645, %v644
    %v649 = vpack.c.bf16 %v647, %v646
    %v650 = vld [vmem:[#allocation11] sm:$0xf]
    %v651 = vld [vmem:[#allocation11 + $0x4] sm:$0xf]
    %v652 = vld [vmem:[#allocation11 + $0x8] sm:$0xf]
    %v653 = vld [vmem:[#allocation11 + $0xc] sm:$0xf]
    %v654 = vld [vmem:[#allocation11 + $0x10] sm:$0xf]
    %v655 = vld [vmem:[#allocation11 + $0x14] sm:$0xf]
    %v656 = vld [vmem:[#allocation11 + $0x18] sm:$0xf]
    %v657 = vld [vmem:[#allocation11 + $0x1c] sm:$0xf]
    %v658 = vld [vmem:[#allocation11 + $0x20] sm:$0xf]
    %v659 = vld [vmem:[#allocation11 + $0x24] sm:$0xf]
    %v660 = vld [vmem:[#allocation11 + $0x28] sm:$0xf]
    %v661 = vld [vmem:[#allocation11 + $0x2c] sm:$0xf]
    %v662 = vld [vmem:[#allocation11 + $0x30] sm:$0xf]
    %v663 = vld [vmem:[#allocation11 + $0x34] sm:$0xf]
    %v664 = vld [vmem:[#allocation11 + $0x38] sm:$0xf]
    %v665 = vld [vmem:[#allocation11 + $0x3c] sm:$0xf]
    %v682 = vunpack.c.l.b16 %v650
    %v683 = vunpack.c.l.b16 %v651
    %v684 = vunpack.c.l.b16 %v652
    %v685 = vunpack.c.l.b16 %v653
    %v686 = vunpack.c.l.b16 %v654
    %v687 = vunpack.c.l.b16 %v655
    %v688 = vunpack.c.l.b16 %v656
    %v689 = vunpack.c.l.b16 %v657
    %v690 = vunpack.c.l.b16 %v658
    %v691 = vunpack.c.l.b16 %v659
    %v692 = vunpack.c.l.b16 %v660
    %v693 = vunpack.c.l.b16 %v661
    %v694 = vunpack.c.l.b16 %v662
    %v695 = vunpack.c.l.b16 %v663
    %v696 = vunpack.c.l.b16 %v664
    %v697 = vunpack.c.l.b16 %v665
    %v698 = vpack.c.b16 %v683, %v682
    %v699 = vpack.c.b16 %v685, %v684
    %v700 = vpack.c.b16 %v687, %v686
    %v701 = vpack.c.b16 %v689, %v688
    %v702 = vpack.c.b16 %v691, %v690
    %v703 = vpack.c.b16 %v693, %v692
    %v704 = vpack.c.b16 %v695, %v694
    %v705 = vpack.c.b16 %v697, %v696
    %714 = vmatprep.subr.bf16.mxu0 0
    %715 = vmatpush1.bf16.msra.mxu0 %v705
    %716 = vmatprep.subr.bf16.mxu0 0
    %717 = vmatpush1.bf16.msra.mxu0 %v704
    %718 = vmatprep.subr.bf16.mxu0 0
    %719 = vmatpush1.bf16.msra.mxu0 %v703
    %720 = vmatprep.subr.bf16.mxu0 0
    %721 = vmatpush1.bf16.msra.mxu0 %v702
    %722 = vmatprep.subr.bf16.mxu0 0
    %723 = vmatpush1.bf16.msra.mxu0 %v701
    %724 = vmatprep.subr.bf16.mxu0 0
    %725 = vmatpush1.bf16.msra.mxu0 %v700
    %726 = vmatprep.subr.bf16.mxu0 0
    %727 = vmatpush1.bf16.msra.mxu0 %v699
    %728 = vmatprep.subr.bf16.mxu0 0
    %729 = vmatpush1.bf16.msra.mxu0 %v698
    %730 = vmatprep.subr.bf16.mxu0 0
    %731 = vmatpush2.bf16.msra.mxu0 0
    %732 = vmatprep.subr.bf16.mxu0 0
    %733 = vmatpush2.bf16.msra.mxu0 0
    %734 = vmatprep.subr.bf16.mxu0 0
    %735 = vmatpush2.bf16.msra.mxu0 0
    %736 = vmatprep.subr.bf16.mxu0 0
    %737 = vmatpush2.bf16.msra.mxu0 0
    %738 = vmatprep.subr.bf16.mxu0 0
    %739 = vmatpush2.bf16.msra.mxu0 0
    %740 = vmatprep.subr.bf16.mxu0 0
    %741 = vmatpush2.bf16.msra.mxu0 0
    %742 = vmatprep.subr.bf16.mxu0 0
    %743 = vmatpush2.bf16.msra.mxu0 0
    %744 = vmatprep.subr.bf16.mxu0 0
    %745 = vmatpush2.bf16.msra.mxu0 0
    %746 = vmatprep.mubr.bf16.mxu0 0
    %747 = vmatmul.mubr.bf16.gmra.mxu0 %v648
    %v748 = vpop.f32.mrf.mxu0
    %v749 = vadd.f32 0.0, %v748
    %v750 = vpop.f32.mrf.mxu0
    %v751 = vpop.f32.mrf.mxu0
    %v752 = vadd.f32 0.0, %v751
    %v753 = vpop.f32.mrf.mxu0
    %754 = vmatprep.mubr.bf16.mxu0 0
    %755 = vmatmul.mubr.bf16.gmra.mxu0 %v649
    %v756 = vpop.f32.mrf.mxu0
    %v757 = vadd.f32 0.0, %v756
    %v758 = vpop.f32.mrf.mxu0
    %v759 = vpop.f32.mrf.mxu0
    %v760 = vadd.f32 0.0, %v759
    %v761 = vpop.f32.mrf.mxu0
    %762 = vdwg.mxu0
    %v763 = vld [vmem:[%s9] sm:$0x1]
    %v765 = vlaneseq
    %v766 = vshrl.u32 %v765, 7
    %v767 = vsub.s32 0, %v766
    %v768 = vrot.slane %v763, %v767
    %770 = vmatprep.subr.mxu0 0.0
    %771 = vmatpush1.msra.mxu0 0.0
    %772 = vmatprep.subr.mxu0 0.0
    %773 = vmatpush1.msra.mxu0 0.0
    %774 = vmatprep.subr.mxu0 0.0
    %775 = vmatpush1.msra.mxu0 0.0
    %776 = vmatprep.subr.mxu0 0.0
    %777 = vmatpush1.msra.mxu0 0.0
    %778 = vmatprep.subr.mxu0 0.0
    %779 = vmatpush1.msra.mxu0 0.0
    %780 = vmatprep.subr.mxu0 0.0
    %781 = vmatpush1.msra.mxu0 0.0
    %782 = vmatprep.subr.mxu0 0.0
    %783 = vmatpush1.msra.mxu0 0.0
    %784 = vmatprep.subr.mxu0 0.0
    %785 = vmatpush1.msra.mxu0 0.0
    %786 = vmatprep.subr.mxu0 0.0
    %787 = vmatpush1.msra.mxu0 0.0
    %788 = vmatprep.subr.mxu0 0.0
    %789 = vmatpush1.msra.mxu0 0.0
    %790 = vmatprep.subr.mxu0 0.0
    %791 = vmatpush1.msra.mxu0 0.0
    %792 = vmatprep.subr.mxu0 0.0
    %793 = vmatpush1.msra.mxu0 0.0
    %794 = vmatprep.subr.mxu0 0.0
    %795 = vmatpush1.msra.mxu0 %v760
    %796 = vmatprep.subr.mxu0 0.0
    %797 = vmatpush1.msra.mxu0 %v757
    %798 = vmatprep.subr.mxu0 0.0
    %799 = vmatpush1.msra.mxu0 %v752
    %800 = vmatprep.subr.mxu0 0.0
    %801 = vmatpush1.msra.mxu0 %v749
    %802 = vmatprep.subr.mxu0 0.0
    %803 = vmatpush2.msra.mxu0 0.0
    %804 = vmatprep.subr.mxu0 0.0
    %805 = vmatpush2.msra.mxu0 0.0
    %806 = vmatprep.subr.mxu0 0.0
    %807 = vmatpush2.msra.mxu0 0.0
    %808 = vmatprep.subr.mxu0 0.0
    %809 = vmatpush2.msra.mxu0 0.0
    %810 = vmatprep.subr.mxu0 0.0
    %811 = vmatpush2.msra.mxu0 0.0
    %812 = vmatprep.subr.mxu0 0.0
    %813 = vmatpush2.msra.mxu0 0.0
    %814 = vmatprep.subr.mxu0 0.0
    %815 = vmatpush2.msra.mxu0 0.0
    %816 = vmatprep.subr.mxu0 0.0
    %817 = vmatpush2.msra.mxu0 0.0
    %818 = vmatprep.subr.mxu0 0.0
    %819 = vmatpush2.msra.mxu0 0.0
    %820 = vmatprep.subr.mxu0 0.0
    %821 = vmatpush2.msra.mxu0 0.0
    %822 = vmatprep.subr.mxu0 0.0
    %823 = vmatpush2.msra.mxu0 0.0
    %824 = vmatprep.subr.mxu0 0.0
    %825 = vmatpush2.msra.mxu0 0.0
    %826 = vmatprep.subr.mxu0 0.0
    %827 = vmatpush2.msra.mxu0 0.0
    %828 = vmatprep.subr.mxu0 0.0
    %829 = vmatpush2.msra.mxu0 0.0
    %830 = vmatprep.subr.mxu0 0.0
    %831 = vmatpush2.msra.mxu0 0.0
    %832 = vmatprep.subr.mxu0 0.0
    %833 = vmatpush2.msra.mxu0 0.0
    %834 = vmatprep.mubr.f32.mxu0 0.0
    %835 = vmatmul.mubr.f32.gmra.mxu0 %v548
    %v836 = vpop.f32.mrf.mxu0
    %v837 = vadd.f32 %v768, %v836
    %v838 = vpop.f32.mrf.mxu0
    %839 = vmatprep.mubr.f32.mxu0 0.0
    %840 = vmatmul.mubr.f32.gmra.mxu0 %v551
    %v841 = vpop.f32.mrf.mxu0
    %v842 = vadd.f32 %v768, %v841
    %v843 = vpop.f32.mrf.mxu0
    %844 = vmatprep.mubr.f32.mxu0 0.0
    %845 = vmatmul.mubr.f32.gmra.mxu0 %v554
    %v846 = vpop.f32.mrf.mxu0
    %v847 = vadd.f32 %v768, %v846
    %v848 = vpop.f32.mrf.mxu0
    %849 = vmatprep.mubr.f32.mxu0 0.0
    %850 = vmatmul.mubr.f32.gmra.mxu0 %v557
    %v851 = vpop.f32.mrf.mxu0
    %v852 = vadd.f32 %v768, %v851
    %v853 = vpop.f32.mrf.mxu0
    %854 = vdwg.mxu0
    %v855 = vpack.c.bf16 %v842, %v837
    %v856 = vpack.c.bf16 %v852, %v847
    %v857 = vld [vmem:[#allocation13] sm:$0xf]
    %v858 = vld [vmem:[#allocation13 + $0x4] sm:$0xf]
    %v859 = vld [vmem:[#allocation13 + $0x8] sm:$0xf]
    %v860 = vld [vmem:[#allocation13 + $0xc] sm:$0xf]
    %v861 = vld [vmem:[#allocation13 + $0x10] sm:$0xf]
    %v862 = vld [vmem:[#allocation13 + $0x14] sm:$0xf]
    %v863 = vld [vmem:[#allocation13 + $0x18] sm:$0xf]
    %v864 = vld [vmem:[#allocation13 + $0x1c] sm:$0xf]
    %v865 = vld [vmem:[#allocation13 + $0x20] sm:$0xf]
    %v866 = vld [vmem:[#allocation13 + $0x24] sm:$0xf]
    %v867 = vld [vmem:[#allocation13 + $0x28] sm:$0xf]
    %v868 = vld [vmem:[#allocation13 + $0x2c] sm:$0xf]
    %v869 = vld [vmem:[#allocation13 + $0x30] sm:$0xf]
    %v870 = vld [vmem:[#allocation13 + $0x34] sm:$0xf]
    %v871 = vld [vmem:[#allocation13 + $0x38] sm:$0xf]
    %v872 = vld [vmem:[#allocation13 + $0x3c] sm:$0xf]
    %v873 = vld [vmem:[%s11] sm:$0x1]
    %v875 = vlaneseq
    %v876 = vshrl.u32 %v875, 7
    %v877 = vsub.s32 0, %v876
    %v878 = vrot.slane %v873, %v877
    %v896 = vunpack.c.l.b16 %v857
    %v897 = vunpack.c.l.b16 %v858
    %v898 = vunpack.c.l.b16 %v859
    %v899 = vunpack.c.l.b16 %v860
    %v900 = vunpack.c.l.b16 %v861
    %v901 = vunpack.c.l.b16 %v862
    %v902 = vunpack.c.l.b16 %v863
    %v903 = vunpack.c.l.b16 %v864
    %v904 = vunpack.c.l.b16 %v865
    %v905 = vunpack.c.l.b16 %v866
    %v906 = vunpack.c.l.b16 %v867
    %v907 = vunpack.c.l.b16 %v868
    %v908 = vunpack.c.l.b16 %v869
    %v909 = vunpack.c.l.b16 %v870
    %v910 = vunpack.c.l.b16 %v871
    %v911 = vunpack.c.l.b16 %v872
    %v912 = vpack.c.b16 %v897, %v896
    %v913 = vpack.c.b16 %v899, %v898
    %v914 = vpack.c.b16 %v901, %v900
    %v915 = vpack.c.b16 %v903, %v902
    %v916 = vpack.c.b16 %v905, %v904
    %v917 = vpack.c.b16 %v907, %v906
    %v918 = vpack.c.b16 %v909, %v908
    %v919 = vpack.c.b16 %v911, %v910
    %928 = vmatprep.subr.bf16.mxu0 0
    %929 = vmatpush1.bf16.msra.mxu0 %v919
    %930 = vmatprep.subr.bf16.mxu0 0
    %931 = vmatpush1.bf16.msra.mxu0 %v918
    %932 = vmatprep.subr.bf16.mxu0 0
    %933 = vmatpush1.bf16.msra.mxu0 %v917
    %934 = vmatprep.subr.bf16.mxu0 0
    %935 = vmatpush1.bf16.msra.mxu0 %v916
    %936 = vmatprep.subr.bf16.mxu0 0
    %937 = vmatpush1.bf16.msra.mxu0 %v915
    %938 = vmatprep.subr.bf16.mxu0 0
    %939 = vmatpush1.bf16.msra.mxu0 %v914
    %940 = vmatprep.subr.bf16.mxu0 0
    %941 = vmatpush1.bf16.msra.mxu0 %v913
    %942 = vmatprep.subr.bf16.mxu0 0
    %943 = vmatpush1.bf16.msra.mxu0 %v912
    %944 = vmatprep.subr.bf16.mxu0 0
    %945 = vmatpush2.bf16.msra.mxu0 0
    %946 = vmatprep.subr.bf16.mxu0 0
    %947 = vmatpush2.bf16.msra.mxu0 0
    %948 = vmatprep.subr.bf16.mxu0 0
    %949 = vmatpush2.bf16.msra.mxu0 0
    %950 = vmatprep.subr.bf16.mxu0 0
    %951 = vmatpush2.bf16.msra.mxu0 0
    %952 = vmatprep.subr.bf16.mxu0 0
    %953 = vmatpush2.bf16.msra.mxu0 0
    %954 = vmatprep.subr.bf16.mxu0 0
    %955 = vmatpush2.bf16.msra.mxu0 0
    %956 = vmatprep.subr.bf16.mxu0 0
    %957 = vmatpush2.bf16.msra.mxu0 0
    %958 = vmatprep.subr.bf16.mxu0 0
    %959 = vmatpush2.bf16.msra.mxu0 0
    %960 = vmatprep.mubr.bf16.mxu0 0
    %961 = vmatmul.mubr.bf16.gmra.mxu0 %v855
    %v962 = vpop.f32.mrf.mxu0
    %v963 = vadd.f32 %v878, %v962
    %v964 = vpop.f32.mrf.mxu0
    %v965 = vpop.f32.mrf.mxu0
    %v966 = vadd.f32 %v878, %v965
    %v967 = vpop.f32.mrf.mxu0
    %968 = vmatprep.mubr.bf16.mxu0 0
    %969 = vmatmul.mubr.bf16.gmra.mxu0 %v856
    %v970 = vpop.f32.mrf.mxu0
    %v971 = vadd.f32 %v878, %v970
    %v972 = vpop.f32.mrf.mxu0
    %v973 = vpop.f32.mrf.mxu0
    %v974 = vadd.f32 %v878, %v973
    %v975 = vpop.f32.mrf.mxu0
    %976 = vdwg.mxu0
    %vm977 = vcmp.gt.f32.partialorder %v963, 0.0
    %vm978 = vcmp.gt.f32.partialorder %v966, 0.0
    %vm979 = vcmp.gt.f32.partialorder %v971, 0.0
    %vm980 = vcmp.gt.f32.partialorder %v974, 0.0
    %v981 = vmin.f32 %v963, 0.0
    %v982 = vmin.f32 %v966, 0.0
    %v983 = vmin.f32 %v971, 0.0
    %v984 = vmin.f32 %v974, 0.0
    %v985 = vmul.f32 %v981, 1.442695
    %v986 = vpow.pop %v985
    %v987 = vmul.f32 %v982, 1.442695
    %v988 = vpow.pop %v987
    %v989 = vmul.f32 %v983, 1.442695
    %v990 = vpow.pop %v989
    %v991 = vmul.f32 %v984, 1.442695
    %v992 = vpow.pop %v991
    %v993 = vsub.f32 %v986, 1.0
    %v994 = vsub.f32 %v988, 1.0
    %v995 = vsub.f32 %v990, 1.0
    %v996 = vsub.f32 %v992, 1.0
    %v997 = vsel %vm977, %v963, %v993
    %v998 = vsel %vm978, %v966, %v994
    %v999 = vsel %vm979, %v971, %v995
    %v1000 = vsel %vm980, %v974, %v996
    %v1001 = vpack.c.bf16 %v998, %v997
    %v1002 = vpack.c.bf16 %v1000, %v999
    %v1003 = vld [vmem:[#allocation14] sm:$0xf]
    %v1004 = vld [vmem:[#allocation14 + $0x4] sm:$0xf]
    %v1005 = vld [vmem:[#allocation14 + $0x8] sm:$0xf]
    %v1006 = vld [vmem:[#allocation14 + $0xc] sm:$0xf]
    %v1007 = vld [vmem:[#allocation14 + $0x10] sm:$0xf]
    %v1008 = vld [vmem:[#allocation14 + $0x14] sm:$0xf]
    %v1009 = vld [vmem:[#allocation14 + $0x18] sm:$0xf]
    %v1010 = vld [vmem:[#allocation14 + $0x1c] sm:$0xf]
    %v1011 = vld [vmem:[#allocation14 + $0x20] sm:$0xf]
    %v1012 = vld [vmem:[#allocation14 + $0x24] sm:$0xf]
    %v1013 = vld [vmem:[#allocation14 + $0x28] sm:$0xf]
    %v1014 = vld [vmem:[#allocation14 + $0x2c] sm:$0xf]
    %v1015 = vld [vmem:[#allocation14 + $0x30] sm:$0xf]
    %v1016 = vld [vmem:[#allocation14 + $0x34] sm:$0xf]
    %v1017 = vld [vmem:[#allocation14 + $0x38] sm:$0xf]
    %v1018 = vld [vmem:[#allocation14 + $0x3c] sm:$0xf]
    %v1019 = vld [vmem:[%s13] sm:$0x1]
    %v1021 = vlaneseq
    %v1022 = vshrl.u32 %v1021, 7
    %v1023 = vsub.s32 0, %v1022
    %v1024 = vrot.slane %v1019, %v1023
    %v1042 = vunpack.c.l.b16 %v1003
    %v1043 = vunpack.c.l.b16 %v1004
    %v1044 = vunpack.c.l.b16 %v1005
    %v1045 = vunpack.c.l.b16 %v1006
    %v1046 = vunpack.c.l.b16 %v1007
    %v1047 = vunpack.c.l.b16 %v1008
    %v1048 = vunpack.c.l.b16 %v1009
    %v1049 = vunpack.c.l.b16 %v1010
    %v1050 = vunpack.c.l.b16 %v1011
    %v1051 = vunpack.c.l.b16 %v1012
    %v1052 = vunpack.c.l.b16 %v1013
    %v1053 = vunpack.c.l.b16 %v1014
    %v1054 = vunpack.c.l.b16 %v1015
    %v1055 = vunpack.c.l.b16 %v1016
    %v1056 = vunpack.c.l.b16 %v1017
    %v1057 = vunpack.c.l.b16 %v1018
    %v1058 = vpack.c.b16 %v1043, %v1042
    %v1059 = vpack.c.b16 %v1045, %v1044
    %v1060 = vpack.c.b16 %v1047, %v1046
    %v1061 = vpack.c.b16 %v1049, %v1048
    %v1062 = vpack.c.b16 %v1051, %v1050
    %v1063 = vpack.c.b16 %v1053, %v1052
    %v1064 = vpack.c.b16 %v1055, %v1054
    %v1065 = vpack.c.b16 %v1057, %v1056
    %1074 = vmatprep.subr.bf16.mxu0 0
    %1075 = vmatpush1.bf16.msra.mxu0 %v1065
    %1076 = vmatprep.subr.bf16.mxu0 0
    %1077 = vmatpush1.bf16.msra.mxu0 %v1064
    %1078 = vmatprep.subr.bf16.mxu0 0
    %1079 = vmatpush1.bf16.msra.mxu0 %v1063
    %1080 = vmatprep.subr.bf16.mxu0 0
    %1081 = vmatpush1.bf16.msra.mxu0 %v1062
    %1082 = vmatprep.subr.bf16.mxu0 0
    %1083 = vmatpush1.bf16.msra.mxu0 %v1061
    %1084 = vmatprep.subr.bf16.mxu0 0
    %1085 = vmatpush1.bf16.msra.mxu0 %v1060
    %1086 = vmatprep.subr.bf16.mxu0 0
    %1087 = vmatpush1.bf16.msra.mxu0 %v1059
    %1088 = vmatprep.subr.bf16.mxu0 0
    %1089 = vmatpush1.bf16.msra.mxu0 %v1058
    %1090 = vmatprep.subr.bf16.mxu0 0
    %1091 = vmatpush2.bf16.msra.mxu0 0
    %1092 = vmatprep.subr.bf16.mxu0 0
    %1093 = vmatpush2.bf16.msra.mxu0 0
    %1094 = vmatprep.subr.bf16.mxu0 0
    %1095 = vmatpush2.bf16.msra.mxu0 0
    %1096 = vmatprep.subr.bf16.mxu0 0
    %1097 = vmatpush2.bf16.msra.mxu0 0
    %1098 = vmatprep.subr.bf16.mxu0 0
    %1099 = vmatpush2.bf16.msra.mxu0 0
    %1100 = vmatprep.subr.bf16.mxu0 0
    %1101 = vmatpush2.bf16.msra.mxu0 0
    %1102 = vmatprep.subr.bf16.mxu0 0
    %1103 = vmatpush2.bf16.msra.mxu0 0
    %1104 = vmatprep.subr.bf16.mxu0 0
    %1105 = vmatpush2.bf16.msra.mxu0 0
    %1106 = vmatprep.mubr.bf16.mxu0 0
    %1107 = vmatmul.mubr.bf16.gmra.mxu0 %v1001
    %v1108 = vpop.f32.mrf.mxu0
    %v1109 = vadd.f32 %v1024, %v1108
    %v1110 = vpop.f32.mrf.mxu0
    %v1111 = vpop.f32.mrf.mxu0
    %v1112 = vadd.f32 %v1024, %v1111
    %v1113 = vpop.f32.mrf.mxu0
    %1114 = vmatprep.mubr.bf16.mxu0 0
    %1115 = vmatmul.mubr.bf16.gmra.mxu0 %v1002
    %v1116 = vpop.f32.mrf.mxu0
    %v1117 = vadd.f32 %v1024, %v1116
    %v1118 = vpop.f32.mrf.mxu0
    %v1119 = vpop.f32.mrf.mxu0
    %v1120 = vadd.f32 %v1024, %v1119
    %v1121 = vpop.f32.mrf.mxu0
    %1122 = vdwg.mxu0
    %v1123 = vmul.f32 %v1109, %v1109
    %v1124 = vmul.f32 %v1112, %v1112
    %1125 = vadd.xlane.f32.xlu0 %v1123
    %v1126 = vpop.xlane.xlu0 %1125
    %1127 = vadd.xlane.f32.xlu0 %v1124
    %v1128 = vpop.xlane.xlu0 %1127
    %v1129 = vrsqrt.pop %v1126
    %v1130 = vmul.f32 %v1126, %v1129
    %vm1131 = vcmp.eq.f32.partialorder %v1126, inf
    %v1132 = vsel %vm1131, %v1126, %v1130
    %vm1133 = vcmp.eq.f32.partialorder %v1126, 0.0
    %v1134 = vand.u32 %v1126, 2147483648
    %v1135 = vsel %vm1133, %v1134, %v1132
    %v1136 = vrsqrt.pop %v1128
    %v1137 = vmul.f32 %v1128, %v1136
    %vm1138 = vcmp.eq.f32.partialorder %v1128, inf
    %v1139 = vsel %vm1138, %v1128, %v1137
    %vm1140 = vcmp.eq.f32.partialorder %v1128, 0.0
    %v1141 = vand.u32 %v1128, 2147483648
    %v1142 = vsel %vm1140, %v1141, %v1139
    %v1143 = vmax.f32 %v1135, 1e-12
    %v1144 = vmax.f32 %v1142, 1e-12
    %v1145 = vrcp.pop %v1143
    %v1146 = vmul.f32 1.0, %v1145
    %v1147 = vrcp.pop %v1144
    %v1148 = vmul.f32 1.0, %v1147
    %v1149 = vmul.f32 %v1117, %v1117
    %v1150 = vmul.f32 %v1120, %v1120
    %1151 = vadd.xlane.f32.xlu0 %v1149
    %v1152 = vpop.xlane.xlu0 %1151
    %1153 = vadd.xlane.f32.xlu0 %v1150
    %v1154 = vpop.xlane.xlu0 %1153
    %v1155 = vrsqrt.pop %v1152
    %v1156 = vmul.f32 %v1152, %v1155
    %vm1157 = vcmp.eq.f32.partialorder %v1152, inf
    %v1158 = vsel %vm1157, %v1152, %v1156
    %vm1159 = vcmp.eq.f32.partialorder %v1152, 0.0
    %v1160 = vand.u32 %v1152, 2147483648
    %v1161 = vsel %vm1159, %v1160, %v1158
    %v1162 = vrsqrt.pop %v1154
    %v1163 = vmul.f32 %v1154, %v1162
    %vm1164 = vcmp.eq.f32.partialorder %v1154, inf
    %v1165 = vsel %vm1164, %v1154, %v1163
    %vm1166 = vcmp.eq.f32.partialorder %v1154, 0.0
    %v1167 = vand.u32 %v1154, 2147483648
    %v1168 = vsel %vm1166, %v1167, %v1165
    %v1169 = vmax.f32 %v1161, 1e-12
    %v1170 = vmax.f32 %v1168, 1e-12
    %v1171 = vrcp.pop %v1169
    %v1172 = vmul.f32 1.0, %v1171
    %v1173 = vrcp.pop %v1170
    %v1174 = vmul.f32 1.0, %v1173
    %v1175 = vmul.f32 %v1109, %v1146
    %v1176 = vmul.f32 %v1112, %v1148
    %v1177 = vmul.f32 %v1117, %v1172
    %v1178 = vmul.f32 %v1120, %v1174
    %v1179 = vpack.c.bf16 %v1176, %v1175
    %v1180 = vpack.c.bf16 %v1178, %v1177
    %1181 = vmatprep.subr.bf16.mxu0 0
    %1182 = vmatpush1.bf16.xpose.msra.mxu0 0
    %1183 = vmatprep.subr.bf16.mxu0 0
    %1184 = vmatpush1.bf16.xpose.msra.mxu0 0
    %1185 = vmatprep.subr.bf16.mxu0 0
    %1186 = vmatpush1.bf16.xpose.msra.mxu0 0
    %1187 = vmatprep.subr.bf16.mxu0 0
    %1188 = vmatpush1.bf16.xpose.msra.mxu0 0
    %1189 = vmatprep.subr.bf16.mxu0 0
    %1190 = vmatpush1.bf16.xpose.msra.mxu0 0
    %1191 = vmatprep.subr.bf16.mxu0 0
    %1192 = vmatpush1.bf16.xpose.msra.mxu0 0
    %1193 = vmatprep.subr.bf16.mxu0 0
    %1194 = vmatpush1.bf16.xpose.msra.mxu0 0
    %1195 = vmatprep.subr.bf16.mxu0 0
    %1196 = vmatpush1.bf16.xpose.msra.mxu0 %v1179
    %1197 = vmatprep.subr.bf16.mxu0 0
    %1198 = vmatpush2.bf16.xpose.msra.mxu0 0
    %1199 = vmatprep.subr.bf16.mxu0 0
    %1200 = vmatpush2.bf16.xpose.msra.mxu0 0
    %1201 = vmatprep.subr.bf16.mxu0 0
    %1202 = vmatpush2.bf16.xpose.msra.mxu0 0
    %1203 = vmatprep.subr.bf16.mxu0 0
    %1204 = vmatpush2.bf16.xpose.msra.mxu0 0
    %1205 = vmatprep.subr.bf16.mxu0 0
    %1206 = vmatpush2.bf16.xpose.msra.mxu0 0
    %1207 = vmatprep.subr.bf16.mxu0 0
    %1208 = vmatpush2.bf16.xpose.msra.mxu0 0
    %1209 = vmatprep.subr.bf16.mxu0 0
    %1210 = vmatpush2.bf16.xpose.msra.mxu0 0
    %1211 = vmatprep.subr.bf16.mxu0 0
    %1212 = vmatpush2.bf16.xpose.msra.mxu0 0
    %1213 = vmatprep.mubr.bf16.mxu0 0
    %1214 = vmatmul.mubr.bf16.gmra.mxu0 %v1179
    %v1215 = vpop.f32.mrf.mxu0
    %v1216 = vadd.f32 0.0, %v1215
    %v1217 = vpop.f32.mrf.mxu0
    %v1218 = vpop.f32.mrf.mxu0
    %v1219 = vadd.f32 0.0, %v1218
    %v1220 = vpop.f32.mrf.mxu0
    %1221 = vdwg.mxu0
    %v1222 = vmul.f32 %v1216, 2.0
    %v1223 = vmul.f32 %v1219, 2.0
    %v1224 = vmul.f32 %v1222, 1.442695
    %v1225 = vpow.pop %v1224
    %v1226 = vmul.f32 %v1223, 1.442695
    %v1227 = vpow.pop %v1226
    %1228 = vmatprep.subr.bf16.mxu0 0
    %1229 = vmatpush1.bf16.xpose.msra.mxu0 0
    %1230 = vmatprep.subr.bf16.mxu0 0
    %1231 = vmatpush1.bf16.xpose.msra.mxu0 0
    %1232 = vmatprep.subr.bf16.mxu0 0
    %1233 = vmatpush1.bf16.xpose.msra.mxu0 0
    %1234 = vmatprep.subr.bf16.mxu0 0
    %1235 = vmatpush1.bf16.xpose.msra.mxu0 0
    %1236 = vmatprep.subr.bf16.mxu0 0
    %1237 = vmatpush1.bf16.xpose.msra.mxu0 0
    %1238 = vmatprep.subr.bf16.mxu0 0
    %1239 = vmatpush1.bf16.xpose.msra.mxu0 0
    %1240 = vmatprep.subr.bf16.mxu0 0
    %1241 = vmatpush1.bf16.xpose.msra.mxu0 0
    %1242 = vmatprep.subr.bf16.mxu0 0
    %1243 = vmatpush1.bf16.xpose.msra.mxu0 %v1180
    %1244 = vmatprep.subr.bf16.mxu0 0
    %1245 = vmatpush2.bf16.xpose.msra.mxu0 0
    %1246 = vmatprep.subr.bf16.mxu0 0
    %1247 = vmatpush2.bf16.xpose.msra.mxu0 0
    %1248 = vmatprep.subr.bf16.mxu0 0
    %1249 = vmatpush2.bf16.xpose.msra.mxu0 0
    %1250 = vmatprep.subr.bf16.mxu0 0
    %1251 = vmatpush2.bf16.xpose.msra.mxu0 0
    %1252 = vmatprep.subr.bf16.mxu0 0
    %1253 = vmatpush2.bf16.xpose.msra.mxu0 0
    %1254 = vmatprep.subr.bf16.mxu0 0
    %1255 = vmatpush2.bf16.xpose.msra.mxu0 0
    %1256 = vmatprep.subr.bf16.mxu0 0
    %1257 = vmatpush2.bf16.xpose.msra.mxu0 0
    %1258 = vmatprep.subr.bf16.mxu0 0
    %1259 = vmatpush2.bf16.xpose.msra.mxu0 0
    %1260 = vmatprep.mubr.bf16.mxu0 0
    %1261 = vmatmul.mubr.bf16.gmra.mxu0 %v1180
    %v1262 = vpop.f32.mrf.mxu0
    %v1263 = vadd.f32 0.0, %v1262
    %v1264 = vpop.f32.mrf.mxu0
    %v1265 = vpop.f32.mrf.mxu0
    %v1266 = vadd.f32 0.0, %v1265
    %v1267 = vpop.f32.mrf.mxu0
    %1268 = vdwg.mxu0
    %v1269 = vmul.f32 %v1263, 2.0
    %v1270 = vmul.f32 %v1266, 2.0
    %v1271 = vmul.f32 %v1269, 1.442695
    %v1272 = vpow.pop %v1271
    %v1273 = vmul.f32 %v1270, 1.442695
    %v1274 = vpow.pop %v1273
    %1275 = vmatprep.subr.bf16.mxu0 0
    %1276 = vmatpush1.bf16.xpose.msra.mxu0 0
    %1277 = vmatprep.subr.bf16.mxu0 0
    %1278 = vmatpush1.bf16.xpose.msra.mxu0 0
    %1279 = vmatprep.subr.bf16.mxu0 0
    %1280 = vmatpush1.bf16.xpose.msra.mxu0 0
    %1281 = vmatprep.subr.bf16.mxu0 0
    %1282 = vmatpush1.bf16.xpose.msra.mxu0 0
    %1283 = vmatprep.subr.bf16.mxu0 0
    %1284 = vmatpush1.bf16.xpose.msra.mxu0 0
    %1285 = vmatprep.subr.bf16.mxu0 0
    %1286 = vmatpush1.bf16.xpose.msra.mxu0 0
    %1287 = vmatprep.subr.bf16.mxu0 0
    %1288 = vmatpush1.bf16.xpose.msra.mxu0 0
    %1289 = vmatprep.subr.bf16.mxu0 0
    %1290 = vmatpush1.bf16.xpose.msra.mxu0 %v1180
    %1291 = vmatprep.subr.bf16.mxu0 0
    %1292 = vmatpush2.bf16.xpose.msra.mxu0 0
    %1293 = vmatprep.subr.bf16.mxu0 0
    %1294 = vmatpush2.bf16.xpose.msra.mxu0 0
    %1295 = vmatprep.subr.bf16.mxu0 0
    %1296 = vmatpush2.bf16.xpose.msra.mxu0 0
    %1297 = vmatprep.subr.bf16.mxu0 0
    %1298 = vmatpush2.bf16.xpose.msra.mxu0 0
    %1299 = vmatprep.subr.bf16.mxu0 0
    %1300 = vmatpush2.bf16.xpose.msra.mxu0 0
    %1301 = vmatprep.subr.bf16.mxu0 0
    %1302 = vmatpush2.bf16.xpose.msra.mxu0 0
    %1303 = vmatprep.subr.bf16.mxu0 0
    %1304 = vmatpush2.bf16.xpose.msra.mxu0 0
    %1305 = vmatprep.subr.bf16.mxu0 0
    %1306 = vmatpush2.bf16.xpose.msra.mxu0 0
    %1307 = vmatprep.mubr.bf16.mxu0 0
    %1308 = vmatmul.mubr.bf16.gmra.mxu0 %v1179
    %v1309 = vpop.f32.mrf.mxu0
    %v1310 = vadd.f32 0.0, %v1309
    %v1311 = vpop.f32.mrf.mxu0
    %v1312 = vpop.f32.mrf.mxu0
    %v1313 = vadd.f32 0.0, %v1312
    %v1314 = vpop.f32.mrf.mxu0
    %1315 = vdwg.mxu0
    %v1316 = vmul.f32 %v1310, 2.0
    %v1317 = vmul.f32 %v1313, 2.0
    %v1318 = vmul.f32 %v1316, 1.442695
    %v1319 = vpow.pop %v1318
    %v1320 = vmul.f32 %v1317, 1.442695
    %v1321 = vpow.pop %v1320
    %v1322 = vmul.f32 %v1175, %v1177
    %v1323 = vmul.f32 %v1176, %v1178
    %1324 = vadd.xlane.f32.xlu0 %v1322
    %v1325 = vpop.xlane.xlu0 %1324
    %1326 = vadd.xlane.f32.xlu0 %v1323
    %v1327 = vpop.xlane.xlu0 %1326
    %v1328 = vmul.f32 %v1325, 2.0
    %v1329 = vmul.f32 %v1327, 2.0
    %v1330 = vmul.f32 %v1328, 1.442695
    %v1331 = vpow.pop %v1330
    %v1332 = vmul.f32 %v1329, 1.442695
    %v1333 = vpow.pop %v1332
    %vm1334 = vcmask 130048
    %v1335 = vsel %vm1334, %v1225, 0.0
    %1336 = vadd.xlane.f32.xlu0 %v1335
    %v1337 = vpop.xlane.xlu0 %1336
    %v1338 = vsel %vm1334, %v1227, 0.0
    %1339 = vadd.xlane.f32.xlu0 %v1338
    %v1340 = vpop.xlane.xlu0 %1339
    %v1341 = vsel %vm1334, %v1319, 0.0
    %1342 = vadd.xlane.f32.xlu0 %v1341
    %v1343 = vpop.xlane.xlu0 %1342
    %v1344 = vsel %vm1334, %v1321, 0.0
    %1345 = vadd.xlane.f32.xlu0 %v1344
    %v1346 = vpop.xlane.xlu0 %1345
    %v1347 = vsel %vm1334, %v1272, 0.0
    %v1348 = vsel %vm1334, %v1274, 0.0
    %v1349 = vadd.f32 %v1347, %v1348
    %v1350 = vrot.slane %v1349, 4
    %v1351 = vadd.f32 %v1349, %v1350
    %v1352 = vrot.slane %v1351, 2
    %v1353 = vadd.f32 %v1351, %v1352
    %v1354 = vrot.slane %v1353, 1
    %v1355 = vadd.f32 %v1353, %v1354
    %v1356 = vadd.f32 %v1341, %v1344
    %v1357 = vrot.slane %v1356, 4
    %v1358 = vadd.f32 %v1356, %v1357
    %v1359 = vrot.slane %v1358, 2
    %v1360 = vadd.f32 %v1358, %v1359
    %v1361 = vrot.slane %v1360, 1
    %v1362 = vadd.f32 %v1360, %v1361
    %v1363 = vadd.f32 %v1337, %v1343
    %v1364 = vadd.f32 %v1340, %v1346
    %v1365 = vsub.f32 %v1363, 7.389056
    %v1366 = vsub.f32 %v1364, 7.389056
    %v1367 = vadd.f32 %v1355, %v1362
    %v1368 = vsub.f32 %v1367, 7.389056
    %v1369 = vlog2.pop %v1365
    %v1370 = vmul.f32 %v1369, 0.6931472
    %v1371 = vlog2.pop %v1366
    %v1372 = vmul.f32 %v1371, 0.6931472
    %v1373 = vadd.f32 %v1370, %v1372
    %v1374 = vrot.slane %v1373, 4
    %v1375 = vadd.f32 %v1373, %v1374
    %v1376 = vrot.slane %v1375, 2
    %v1377 = vadd.f32 %v1375, %v1376
    %v1378 = vrot.slane %v1377, 1
    %v1379 = vadd.f32 %v1377, %v1378
    %v1380 = vlog2.pop %v1368
    %v1381 = vmul.f32 %v1380, 0.6931472
    %v1382 = vsel %vm1334, %v1381, 0.0
    %1383 = vadd.xlane.f32.xlu0 %v1382
    %v1384 = vpop.xlane.xlu0 %1383
    %v1385 = vlog2.pop %v1331
    %v1386 = vmul.f32 %v1385, 0.6931472
    %v1387 = vlog2.pop %v1333
    %v1388 = vmul.f32 %v1387, 0.6931472
    %v1389 = vadd.f32 %v1386, %v1388
    %v1390 = vrot.slane %v1389, 4
    %v1391 = vadd.f32 %v1389, %v1390
    %v1392 = vrot.slane %v1391, 2
    %v1393 = vadd.f32 %v1391, %v1392
    %v1394 = vrot.slane %v1393, 1
    %v1395 = vadd.f32 %v1393, %v1394
    %v1396 = vadd.f32 %v1379, %v1384
    %v1397 = vmul.f32 %v1395, 2.0
    %v1398 = vsub.f32 %v1396, %v1397
    %v1399 = vmul.f32 %v1398, 0.03125
    %vm1400 = vcmask 0
    %1401 = vst.msk [vmem:[#allocation16] sm:$0x1] %vm1400, %v1399
    // Predicated region
    $region90: #{gscl_pallas.1} parent=1 // pred_check
      _
    $region91: #{gscl_pallas.1} parent=1 // pred_check_branch
      %1403 = sbr.rel (0) target = $region93
    $region92: #{gscl_pallas.1} parent=1 // pred_region
      %s1405 = ssub.s32 16, 16
      %1406 = vsyncadd [#allocation4], %s1405
      %s1408 = sshll.u32 [#allocation16], 4
      %s1409 = int_to_ptr.vmem [resolvable:$true] %s1408
      %1411 = dma.vmem_to_hbm [thread:$0]  %s1409, 16, %s14, [#allocation4]
    $region93: #{gscl_pallas.1} parent=1 // pred_fallthru
      _
    // Predicated region
    $region94: #{gscl_pallas.1} parent=1 // pred_check
      _
    $region95: #{gscl_pallas.1} parent=1 // pred_check_branch
      %1413 = sbr.rel (0) target = $region97
    $region96: #{gscl_pallas.1} parent=1 // pred_region
      %1414 = dma.done [#allocation4], 16
    $region97: #{gscl_pallas.1} parent=1 // pred_fallthru
      _
    %1415 = vsyncpa [#allocation3], 1
    %1416 = vsyncpa [#allocation6], 1
    %1417 = vsyncpa [#allocation9], 1
    %1418 = vsyncpa [#allocation12], 1
    %1419 = vsyncpa [#allocation15], 1
    %1420 = vsyncpa [#allocation4], 1

</llo_original>
